<compile_context>
chip_gen: v7x
topology: tpu7x:2x2x1
jax: 0.10.0
libtpu: 0.0.40
codegen_flags: <defaults>
</compile_context>

<pallas_src>
import functools

import jax
import jax.numpy as jnp
from jax.experimental import pallas as pl
from jax.experimental.pallas import tpu as pltpu


def _propagator_kernel(Ain_ref, Aout_ref, sin_ref, sout_ref, cur_ref,
                       wr_ref, wz_ref, wt_ref, br_ref, bz_ref, bt_ref,
                       out_ref):
    # Tiles per grid step:
    #   Ain_ref/Aout_ref : (TB, N, NE)
    #   sin_ref/sout_ref : (TB, NE, D)
    #   cur_ref          : (TB*N, D)   pre-flattened 2D slab (no in-kernel reshape)
    #   wr/wz/wt_ref     : (3, D, D)   stacked per-source weights [a_in, a_out, cur]
    #   br/bz/bt_ref     : (1, D)
    #   out_ref          : (TB*N, D)
    f32 = jnp.float32
    TB, N, _ = Ain_ref.shape
    D = cur_ref.shape[-1]

    # Per-direction message aggregation: batched MXU contraction over NE.
    a_in = jnp.einsum('bnm,bmd->bnd', Ain_ref[...], sin_ref[...],
                      preferred_element_type=f32).reshape(TB * N, D)
    a_out = jnp.einsum('bnm,bmd->bnd', Aout_ref[...], sout_ref[...],
                       preferred_element_type=f32).reshape(TB * N, D)
    cur = cur_ref[...].astype(f32)

    def gate(w_ref, b_ref, cur_term):
        # No [a_in|a_out|cur] concat and no sub-128-lane output slices:
        # three dots per gate against per-source (D, D) weight blocks.
        return (jnp.dot(a_in, w_ref[0], preferred_element_type=f32)
                + jnp.dot(a_out, w_ref[1], preferred_element_type=f32)
                + jnp.dot(cur_term, w_ref[2], preferred_element_type=f32)
                + b_ref[...])

    r = jax.nn.sigmoid(gate(wr_ref, br_ref, cur))
    z = jax.nn.sigmoid(gate(wz_ref, bz_ref, cur))
    h_hat = jnp.tanh(gate(wt_ref, bt_ref, r * cur))

    # (1 - z) * cur + z * h_hat  ==  cur + z * (h_hat - cur)
    out_ref[...] = (cur + z * (h_hat - cur)).astype(out_ref.dtype)


def _pad_elems(rows, cols):
    # Elements after (8, 128) last-two-dims VMEM tile padding (f32 granularity).
    return ((rows + 7) // 8 * 8) * ((cols + 127) // 128 * 128)


@functools.partial(jax.jit, static_argnames=("batch_tile", "cast_inputs_bf16"))
def propagator_forward(state_in, state_out, state_cur, A,
                       wr, br, wz, bz, wt, bt,
                       *, batch_tile=None, cast_inputs_bf16=False):
    """GGNN gated propagator forward.

    state_in/state_out : (B, n_node*n_edge_types, D)
    state_cur          : (B, n_node, D)
    A                  : (B, n_node, 2*n_node*n_edge_types)
    wr/wz/wt           : (D, 3D) PyTorch Linear layout; br/bz/bt : (D,)
    """
    B, N, D = state_cur.shape
    NE = state_in.shape[1]
    f32 = jnp.float32

    # ---- wrapper-side layout prep (free XLA slices / transposes) ----
    in_dtype = jnp.bfloat16 if cast_inputs_bf16 else f32
    A_in = A[:, :, :NE].astype(in_dtype)
    A_out = A[:, :, NE:].astype(in_dtype)
    s_in = state_in.astype(in_dtype)
    s_out = state_out.astype(in_dtype)
    cur2 = state_cur.reshape(B * N, D)          # 2D slab: no in-kernel reshape

    def stack_w(w):
        # torch Linear (D, 3D) -> (3, D, D): per-source blocks for [a_in, a_out, cur]
        wT = w.T.astype(f32)
        return jnp.stack([wT[:D], wT[D:2 * D], wT[2 * D:]])

    Wr, Wz, Wt = stack_w(wr), stack_w(wz), stack_w(wt)
    b_r = br.astype(f32).reshape(1, D)
    b_z = bz.astype(f32).reshape(1, D)
    b_t = bt.astype(f32).reshape(1, D)

    # ---- padding-aware VMEM accounting + batch-tile selection ----
    itemsize = 2 if cast_inputs_bf16 else 4

    def step_bytes(t):
        data = itemsize * t * (2 * _pad_elems(N, NE) + 2 * _pad_elems(NE, D))
        curout = 4 * 2 * _pad_elems(t * N, D)
        return data + curout

    weight_bytes = 4 * (3 * 3 * _pad_elems(D, D) + 3 * _pad_elems(1, D))

    try:
        vmem_cap = int(getattr(pltpu.get_tpu_info(), "vmem_capacity_bytes",
                               64 << 20))
    except Exception:  # pragma: no cover - conservative fallback (v7x = 64 MiB)
        vmem_cap = 64 << 20
    data_budget = vmem_cap // 2

    if batch_tile is None:
        divisors = [t for t in range(1, B + 1) if B % t == 0]
        rows_ok = lambda t: (t * N) % 8 == 0 or t == B       # 2D block (8,·) rule
        budget_ok = lambda t: 2 * step_bytes(t) <= data_budget  # double-buffered
        grid_ok = lambda t: (B // t) >= 2 or B == 1           # keep both v7x TCs busy
        batch_tile = B
        for preds in ((grid_ok, rows_ok, budget_ok),
                      (rows_ok, budget_ok),
                      (rows_ok,)):
            cands = [t for t in divisors if all(p(t) for p in preds)]
            if cands:
                batch_tile = max(cands)
                break
    TB = batch_tile
    assert B % TB == 0, "batch must be divisible by batch_tile"

    vmem_limit = int(min(max(2 * step_bytes(TB) + 2 * weight_bytes + (4 << 20),
                             16 << 20),
                         (vmem_cap * 3) // 4))

    cost = pl.CostEstimate(
        flops=2 * B * N * NE * D * 2 + 9 * 2 * B * N * D * D,
        transcendentals=3 * B * N * D,
        bytes_accessed=(itemsize * B * (2 * N * NE + 2 * NE * D)
                        + 4 * (2 * B * N * D + 9 * D * D + 3 * D)))

    batched3 = lambda s1, s2: pl.BlockSpec((TB, s1, s2), lambda b: (b, 0, 0))
    shared = lambda shp: pl.BlockSpec(shp, lambda b: (0,) * len(shp))
    rows2 = pl.BlockSpec((TB * N, D), lambda b: (b, 0))

    out2 = pl.pallas_call(
        _propagator_kernel,
        out_shape=jax.ShapeDtypeStruct((B * N, D), state_cur.dtype),
        grid_spec=pltpu.PrefetchScalarGridSpec(
            num_scalar_prefetch=0,
            grid=(B // TB,),
            in_specs=[
                batched3(N, NE),        # A_in
                batched3(N, NE),        # A_out
                batched3(NE, D),        # state_in
                batched3(NE, D),        # state_out
                rows2,                  # state_cur, pre-flattened (B*N, D)
                shared((3, D, D)),      # Wr
                shared((3, D, D)),      # Wz
                shared((3, D, D)),      # Wt
                shared((1, D)),         # br
                shared((1, D)),         # bz
                shared((1, D)),         # bt
            ],
            out_specs=rows2,
        ),
        compiler_params=pltpu.CompilerParams(
            dimension_semantics=("parallel",),
            vmem_limit_bytes=vmem_limit),
        cost_estimate=cost,
    )(A_in, A_out, s_in, s_out, cur2, Wr, Wz, Wt, b_r, b_z, b_t)

    return out2.reshape(B, N, D)


def _init_linear(key, in_dim, out_dim):
    # PyTorch nn.Linear default init: U(-k, k), k = 1/sqrt(in_dim).
    kw, kb = jax.random.split(key)
    k = 1.0 / jnp.sqrt(jnp.float32(in_dim))
    w = jax.random.uniform(kw, (out_dim, in_dim), jnp.float32, -k, k)  # (out, in)
    b = jax.random.uniform(kb, (out_dim,), jnp.float32, -k, k)
    return w, b


def _reference(state_in, state_out, state_cur, A, params, n_node, n_edge_types):
    # Pure-JAX reference mirroring the PyTorch forward exactly.
    (wr, br), (wz, bz), (wt, bt) = params
    NE = n_node * n_edge_types
    A_in, A_out = A[:, :, :NE], A[:, :, NE:]
    a_in = jnp.einsum('bnm,bmd->bnd', A_in, state_in)
    a_out = jnp.einsum('bnm,bmd->bnd', A_out, state_out)
    a = jnp.concatenate([a_in, a_out, state_cur], axis=2)
    r = jax.nn.sigmoid(a @ wr.T + br)
    z = jax.nn.sigmoid(a @ wz.T + bz)
    joined = jnp.concatenate([a_in, a_out, r * state_cur], axis=2)
    h_hat = jnp.tanh(joined @ wt.T + bt)
    return (1.0 - z) * state_cur + z * h_hat


if __name__ == "__main__":
    # Small, deterministic problem.
    B, state_dim, n_node, n_edge_types = 4, 32, 8, 2
    NE = n_node * n_edge_types

    root = jax.random.PRNGKey(0)
    k_si, k_so, k_sc, k_A, k_r, k_z, k_t = jax.random.split(root, 7)

    state_in = jax.random.normal(k_si, (B, NE, state_dim), jnp.float32)
    state_out = jax.random.normal(k_so, (B, NE, state_dim), jnp.float32)
    state_cur = jax.random.normal(k_sc, (B, n_node, state_dim), jnp.float32)
    A = jax.random.uniform(k_A, (B, n_node, 2 * NE), jnp.float32)

    wr, br = _init_linear(k_r, 3 * state_dim, state_dim)   # torch layout (D, 3D)
    wz, bz = _init_linear(k_z, 3 * state_dim, state_dim)
    wt, bt = _init_linear(k_t, 3 * state_dim, state_dim)

    out = propagator_forward(state_in, state_out, state_cur, A,
                             wr, br, wz, bz, wt, bt)
    out = jax.block_until_ready(out)

    ref = _reference(state_in, state_out, state_cur, A,
                     [(wr, br), (wz, bz), (wt, bt)], n_node, n_edge_types)
    assert out.shape == (B, n_node, state_dim)
    assert jnp.allclose(out, ref, atol=1e-4, rtol=1e-4), "mismatch vs reference"

    print("KERNEL_OK")
</pallas_src>

<mosaic_0001>
module attributes {stable_mosaic.version = 11 : i64} {
  func.func @_propagator_kernel(%arg0: i32, %arg1: memref<2x8x16xf32, #tpu.memory_space<vmem>>, %arg2: memref<2x8x16xf32, #tpu.memory_space<vmem>>, %arg3: memref<2x16x32xf32, #tpu.memory_space<vmem>>, %arg4: memref<2x16x32xf32, #tpu.memory_space<vmem>>, %arg5: memref<16x32xf32, #tpu.memory_space<vmem>>, %arg6: memref<3x32x32xf32, #tpu.memory_space<vmem>>, %arg7: memref<3x32x32xf32, #tpu.memory_space<vmem>>, %arg8: memref<3x32x32xf32, #tpu.memory_space<vmem>>, %arg9: memref<1x32xf32, #tpu.memory_space<vmem>>, %arg10: memref<1x32xf32, #tpu.memory_space<vmem>>, %arg11: memref<1x32xf32, #tpu.memory_space<vmem>>, %arg12: memref<16x32xf32, #tpu.memory_space<vmem>>) attributes {dimension_semantics = [#tpu.dimension_semantics<parallel>], iteration_bounds = array<i64: 2>, scalar_prefetch = 0 : i64, scratch_operands = 0 : i64, tpu.core_type = #tpu.core_type<tc>, window_params = [{transform_indices = @transform_0, window_bounds = array<i64: 2, 8, 16>}, {transform_indices = @transform_1, window_bounds = array<i64: 2, 8, 16>}, {transform_indices = @transform_2, window_bounds = array<i64: 2, 16, 32>}, {transform_indices = @transform_3, window_bounds = array<i64: 2, 16, 32>}, {transform_indices = @transform_4, window_bounds = array<i64: 16, 32>}, {pipeline_mode = #tpu.pipeline_mode<synchronous>, transform_indices = @transform_5, window_bounds = array<i64: 3, 32, 32>}, {pipeline_mode = #tpu.pipeline_mode<synchronous>, transform_indices = @transform_6, window_bounds = array<i64: 3, 32, 32>}, {pipeline_mode = #tpu.pipeline_mode<synchronous>, transform_indices = @transform_7, window_bounds = array<i64: 3, 32, 32>}, {pipeline_mode = #tpu.pipeline_mode<synchronous>, transform_indices = @transform_8, window_bounds = array<i64: 1, 32>}, {pipeline_mode = #tpu.pipeline_mode<synchronous>, transform_indices = @transform_9, window_bounds = array<i64: 1, 32>}, {pipeline_mode = #tpu.pipeline_mode<synchronous>, transform_indices = @transform_10, window_bounds = array<i64: 1, 32>}, {transform_indices = @transform_11, window_bounds = array<i64: 16, 32>}]} {
    %c0 = arith.constant 0 : index
    %c0_0 = arith.constant 0 : index
    %c0_1 = arith.constant 0 : index
    %0 = vector.load %arg1[%c0, %c0_0, %c0_1] : memref<2x8x16xf32, #tpu.memory_space<vmem>>, vector<2x8x16xf32>
    %c0_2 = arith.constant 0 : index
    %c0_3 = arith.constant 0 : index
    %c0_4 = arith.constant 0 : index
    %1 = vector.load %arg3[%c0_2, %c0_3, %c0_4] : memref<2x16x32xf32, #tpu.memory_space<vmem>>, vector<2x16x32xf32>
    "tpu.trace_start"() <{level = 10 : i32, message = "bnm,bmd->bnd"}> : () -> ()
    %cst = arith.constant dense<0.000000e+00> : vector<2x8x32xf32>
    %2 = tpu.matmul %0, %1, %cst {dimension_numbers = #tpu.dot_dimension_numbers<[2], [1], [1], [2], [0, 0, 0, 1, 1, 2], [0], [0]>} : vector<2x8x16xf32>, vector<2x16x32xf32>, vector<2x8x32xf32> -> vector<2x8x32xf32>
    "tpu.trace_stop"() : () -> ()
    %3 = vector.shape_cast %2 : vector<2x8x32xf32> to vector<16x32xf32>
    %c0_5 = arith.constant 0 : index
    %c0_6 = arith.constant 0 : index
    %c0_7 = arith.constant 0 : index
    %4 = vector.load %arg2[%c0_5, %c0_6, %c0_7] : memref<2x8x16xf32, #tpu.memory_space<vmem>>, vector<2x8x16xf32>
    %c0_8 = arith.constant 0 : index
    %c0_9 = arith.constant 0 : index
    %c0_10 = arith.constant 0 : index
    %5 = vector.load %arg4[%c0_8, %c0_9, %c0_10] : memref<2x16x32xf32, #tpu.memory_space<vmem>>, vector<2x16x32xf32>
    "tpu.trace_start"() <{level = 10 : i32, message = "bnm,bmd->bnd"}> : () -> ()
    %cst_11 = arith.constant dense<0.000000e+00> : vector<2x8x32xf32>
    %6 = tpu.matmul %4, %5, %cst_11 {dimension_numbers = #tpu.dot_dimension_numbers<[2], [1], [1], [2], [0, 0, 0, 1, 1, 2], [0], [0]>} : vector<2x8x16xf32>, vector<2x16x32xf32>, vector<2x8x32xf32> -> vector<2x8x32xf32>
    "tpu.trace_stop"() : () -> ()
    %7 = vector.shape_cast %6 : vector<2x8x32xf32> to vector<16x32xf32>
    %c0_12 = arith.constant 0 : index
    %c0_13 = arith.constant 0 : index
    %8 = vector.load %arg5[%c0_12, %c0_13] : memref<16x32xf32, #tpu.memory_space<vmem>>, vector<16x32xf32>
    %c0_14 = arith.constant 0 : index
    %c0_15 = arith.constant 0 : index
    %c0_16 = arith.constant 0 : index
    %9 = vector.load %arg6[%c0_14, %c0_15, %c0_16] : memref<3x32x32xf32, #tpu.memory_space<vmem>>, vector<1x32x32xf32>
    %10 = vector.shape_cast %9 : vector<1x32x32xf32> to vector<32x32xf32>
    %cst_17 = arith.constant dense<0.000000e+00> : vector<16x32xf32>
    %11 = tpu.matmul %3, %10, %cst_17 {dimension_numbers = #tpu.dot_dimension_numbers<[1], [0], [0], [1], [0, 0, 1, 1], [], []>} : vector<16x32xf32>, vector<32x32xf32>, vector<16x32xf32> -> vector<16x32xf32>
    %c1 = arith.constant 1 : index
    %c0_18 = arith.constant 0 : index
    %c0_19 = arith.constant 0 : index
    %12 = vector.load %arg6[%c1, %c0_18, %c0_19] : memref<3x32x32xf32, #tpu.memory_space<vmem>>, vector<1x32x32xf32>
    %13 = vector.shape_cast %12 : vector<1x32x32xf32> to vector<32x32xf32>
    %cst_20 = arith.constant dense<0.000000e+00> : vector<16x32xf32>
    %14 = tpu.matmul %7, %13, %cst_20 {dimension_numbers = #tpu.dot_dimension_numbers<[1], [0], [0], [1], [0, 0, 1, 1], [], []>} : vector<16x32xf32>, vector<32x32xf32>, vector<16x32xf32> -> vector<16x32xf32>
    %15 = arith.addf %11, %14 : vector<16x32xf32>
    %c2 = arith.constant 2 : index
    %c0_21 = arith.constant 0 : index
    %c0_22 = arith.constant 0 : index
    %16 = vector.load %arg6[%c2, %c0_21, %c0_22] : memref<3x32x32xf32, #tpu.memory_space<vmem>>, vector<1x32x32xf32>
    %17 = vector.shape_cast %16 : vector<1x32x32xf32> to vector<32x32xf32>
    %cst_23 = arith.constant dense<0.000000e+00> : vector<16x32xf32>
    %18 = tpu.matmul %8, %17, %cst_23 {dimension_numbers = #tpu.dot_dimension_numbers<[1], [0], [0], [1], [0, 0, 1, 1], [], []>} : vector<16x32xf32>, vector<32x32xf32>, vector<16x32xf32> -> vector<16x32xf32>
    %19 = arith.addf %15, %18 : vector<16x32xf32>
    %c0_24 = arith.constant 0 : index
    %c0_25 = arith.constant 0 : index
    %20 = vector.load %arg9[%c0_24, %c0_25] : memref<1x32xf32, #tpu.memory_space<vmem>>, vector<1x32xf32>
    %21 = vector.broadcast %20 : vector<1x32xf32> to vector<16x32xf32>
    %22 = arith.addf %19, %21 : vector<16x32xf32>
    %23 = arith.negf %22 : vector<16x32xf32>
    %24 = math.exp %23 : vector<16x32xf32>
    %cst_26 = arith.constant 1.000000e+00 : f32
    %25 = vector.broadcast %cst_26 : f32 to vector<16x32xf32>
    %26 = arith.addf %25, %24 : vector<16x32xf32>
    %27 = arith.divf %25, %26 : vector<16x32xf32>
    %c0_27 = arith.constant 0 : index
    %c0_28 = arith.constant 0 : index
    %c0_29 = arith.constant 0 : index
    %28 = vector.load %arg7[%c0_27, %c0_28, %c0_29] : memref<3x32x32xf32, #tpu.memory_space<vmem>>, vector<1x32x32xf32>
    %29 = vector.shape_cast %28 : vector<1x32x32xf32> to vector<32x32xf32>
    %cst_30 = arith.constant dense<0.000000e+00> : vector<16x32xf32>
    %30 = tpu.matmul %3, %29, %cst_30 {dimension_numbers = #tpu.dot_dimension_numbers<[1], [0], [0], [1], [0, 0, 1, 1], [], []>} : vector<16x32xf32>, vector<32x32xf32>, vector<16x32xf32> -> vector<16x32xf32>
    %c1_31 = arith.constant 1 : index
    %c0_32 = arith.constant 0 : index
    %c0_33 = arith.constant 0 : index
    %31 = vector.load %arg7[%c1_31, %c0_32, %c0_33] : memref<3x32x32xf32, #tpu.memory_space<vmem>>, vector<1x32x32xf32>
    %32 = vector.shape_cast %31 : vector<1x32x32xf32> to vector<32x32xf32>
    %cst_34 = arith.constant dense<0.000000e+00> : vector<16x32xf32>
    %33 = tpu.matmul %7, %32, %cst_34 {dimension_numbers = #tpu.dot_dimension_numbers<[1], [0], [0], [1], [0, 0, 1, 1], [], []>} : vector<16x32xf32>, vector<32x32xf32>, vector<16x32xf32> -> vector<16x32xf32>
    %34 = arith.addf %30, %33 : vector<16x32xf32>
    %c2_35 = arith.constant 2 : index
    %c0_36 = arith.constant 0 : index
    %c0_37 = arith.constant 0 : index
    %35 = vector.load %arg7[%c2_35, %c0_36, %c0_37] : memref<3x32x32xf32, #tpu.memory_space<vmem>>, vector<1x32x32xf32>
    %36 = vector.shape_cast %35 : vector<1x32x32xf32> to vector<32x32xf32>
    %cst_38 = arith.constant dense<0.000000e+00> : vector<16x32xf32>
    %37 = tpu.matmul %8, %36, %cst_38 {dimension_numbers = #tpu.dot_dimension_numbers<[1], [0], [0], [1], [0, 0, 1, 1], [], []>} : vector<16x32xf32>, vector<32x32xf32>, vector<16x32xf32> -> vector<16x32xf32>
    %38 = arith.addf %34, %37 : vector<16x32xf32>
    %c0_39 = arith.constant 0 : index
    %c0_40 = arith.constant 0 : index
    %39 = vector.load %arg10[%c0_39, %c0_40] : memref<1x32xf32, #tpu.memory_space<vmem>>, vector<1x32xf32>
    %40 = vector.broadcast %39 : vector<1x32xf32> to vector<16x32xf32>
    %41 = arith.addf %38, %40 : vector<16x32xf32>
    %42 = arith.negf %41 : vector<16x32xf32>
    %43 = math.exp %42 : vector<16x32xf32>
    %cst_41 = arith.constant 1.000000e+00 : f32
    %44 = vector.broadcast %cst_41 : f32 to vector<16x32xf32>
    %45 = arith.addf %44, %43 : vector<16x32xf32>
    %46 = arith.divf %44, %45 : vector<16x32xf32>
    %47 = arith.mulf %27, %8 : vector<16x32xf32>
    %c0_42 = arith.constant 0 : index
    %c0_43 = arith.constant 0 : index
    %c0_44 = arith.constant 0 : index
    %48 = vector.load %arg8[%c0_42, %c0_43, %c0_44] : memref<3x32x32xf32, #tpu.memory_space<vmem>>, vector<1x32x32xf32>
    %49 = vector.shape_cast %48 : vector<1x32x32xf32> to vector<32x32xf32>
    %cst_45 = arith.constant dense<0.000000e+00> : vector<16x32xf32>
    %50 = tpu.matmul %3, %49, %cst_45 {dimension_numbers = #tpu.dot_dimension_numbers<[1], [0], [0], [1], [0, 0, 1, 1], [], []>} : vector<16x32xf32>, vector<32x32xf32>, vector<16x32xf32> -> vector<16x32xf32>
    %c1_46 = arith.constant 1 : index
    %c0_47 = arith.constant 0 : index
    %c0_48 = arith.constant 0 : index
    %51 = vector.load %arg8[%c1_46, %c0_47, %c0_48] : memref<3x32x32xf32, #tpu.memory_space<vmem>>, vector<1x32x32xf32>
    %52 = vector.shape_cast %51 : vector<1x32x32xf32> to vector<32x32xf32>
    %cst_49 = arith.constant dense<0.000000e+00> : vector<16x32xf32>
    %53 = tpu.matmul %7, %52, %cst_49 {dimension_numbers = #tpu.dot_dimension_numbers<[1], [0], [0], [1], [0, 0, 1, 1], [], []>} : vector<16x32xf32>, vector<32x32xf32>, vector<16x32xf32> -> vector<16x32xf32>
    %54 = arith.addf %50, %53 : vector<16x32xf32>
    %c2_50 = arith.constant 2 : index
    %c0_51 = arith.constant 0 : index
    %c0_52 = arith.constant 0 : index
    %55 = vector.load %arg8[%c2_50, %c0_51, %c0_52] : memref<3x32x32xf32, #tpu.memory_space<vmem>>, vector<1x32x32xf32>
    %56 = vector.shape_cast %55 : vector<1x32x32xf32> to vector<32x32xf32>
    %cst_53 = arith.constant dense<0.000000e+00> : vector<16x32xf32>
    %57 = tpu.matmul %47, %56, %cst_53 {dimension_numbers = #tpu.dot_dimension_numbers<[1], [0], [0], [1], [0, 0, 1, 1], [], []>} : vector<16x32xf32>, vector<32x32xf32>, vector<16x32xf32> -> vector<16x32xf32>
    %58 = arith.addf %54, %57 : vector<16x32xf32>
    %c0_54 = arith.constant 0 : index
    %c0_55 = arith.constant 0 : index
    %59 = vector.load %arg11[%c0_54, %c0_55] : memref<1x32xf32, #tpu.memory_space<vmem>>, vector<1x32xf32>
    %60 = vector.broadcast %59 : vector<1x32xf32> to vector<16x32xf32>
    %61 = arith.addf %58, %60 : vector<16x32xf32>
    %62 = math.tanh %61 : vector<16x32xf32>
    %63 = arith.subf %62, %8 : vector<16x32xf32>
    %64 = arith.mulf %46, %63 : vector<16x32xf32>
    %65 = arith.addf %8, %64 : vector<16x32xf32>
    %c0_56 = arith.constant 0 : index
    %c0_57 = arith.constant 0 : index
    %66 = vector.load %arg12[%c0_56, %c0_57] : memref<16x32xf32, #tpu.memory_space<vmem>>, vector<16x32xf32>
    tpu.vector_store %arg12[%c0_56, %c0_57], %65 {strides = array<i32>} : memref<16x32xf32, #tpu.memory_space<vmem>>, vector<16x32xf32>,
    return
  }
  func.func @transform_0(%arg0: i32) -> (i32, i32, i32) {
    %c0_i32 = arith.constant 0 : i32
    %c0_i32_0 = arith.constant 0 : i32
    %c0_i32_1 = arith.constant 0 : i32
    return %arg0, %c0_i32, %c0_i32_0 : i32, i32, i32
  }
  func.func @transform_1(%arg0: i32) -> (i32, i32, i32) {
    %c0_i32 = arith.constant 0 : i32
    %c0_i32_0 = arith.constant 0 : i32
    %c0_i32_1 = arith.constant 0 : i32
    return %arg0, %c0_i32, %c0_i32_0 : i32, i32, i32
  }
  func.func @transform_2(%arg0: i32) -> (i32, i32, i32) {
    %c0_i32 = arith.constant 0 : i32
    %c0_i32_0 = arith.constant 0 : i32
    %c0_i32_1 = arith.constant 0 : i32
    return %arg0, %c0_i32, %c0_i32_0 : i32, i32, i32
  }
  func.func @transform_3(%arg0: i32) -> (i32, i32, i32) {
    %c0_i32 = arith.constant 0 : i32
    %c0_i32_0 = arith.constant 0 : i32
    %c0_i32_1 = arith.constant 0 : i32
    return %arg0, %c0_i32, %c0_i32_0 : i32, i32, i32
  }
  func.func @transform_4(%arg0: i32) -> (i32, i32) {
    %c0_i32 = arith.constant 0 : i32
    %c0_i32_0 = arith.constant 0 : i32
    return %arg0, %c0_i32 : i32, i32
  }
  func.func @transform_5(%arg0: i32) -> (i32, i32, i32) {
    %c0_i32 = arith.constant 0 : i32
    %c0_i32_0 = arith.constant 0 : i32
    %c0_i32_1 = arith.constant 0 : i32
    %c0_i32_2 = arith.constant 0 : i32
    return %c0_i32, %c0_i32_0, %c0_i32_1 : i32, i32, i32
  }
  func.func @transform_6(%arg0: i32) -> (i32, i32, i32) {
    %c0_i32 = arith.constant 0 : i32
    %c0_i32_0 = arith.constant 0 : i32
    %c0_i32_1 = arith.constant 0 : i32
    %c0_i32_2 = arith.constant 0 : i32
    return %c0_i32, %c0_i32_0, %c0_i32_1 : i32, i32, i32
  }
  func.func @transform_7(%arg0: i32) -> (i32, i32, i32) {
    %c0_i32 = arith.constant 0 : i32
    %c0_i32_0 = arith.constant 0 : i32
    %c0_i32_1 = arith.constant 0 : i32
    %c0_i32_2 = arith.constant 0 : i32
    return %c0_i32, %c0_i32_0, %c0_i32_1 : i32, i32, i32
  }
  func.func @transform_8(%arg0: i32) -> (i32, i32) {
    %c0_i32 = arith.constant 0 : i32
    %c0_i32_0 = arith.constant 0 : i32
    %c0_i32_1 = arith.constant 0 : i32
    return %c0_i32, %c0_i32_0 : i32, i32
  }
  func.func @transform_9(%arg0: i32) -> (i32, i32) {
    %c0_i32 = arith.constant 0 : i32
    %c0_i32_0 = arith.constant 0 : i32
    %c0_i32_1 = arith.constant 0 : i32
    return %c0_i32, %c0_i32_0 : i32, i32
  }
  func.func @transform_10(%arg0: i32) -> (i32, i32) {
    %c0_i32 = arith.constant 0 : i32
    %c0_i32_0 = arith.constant 0 : i32
    %c0_i32_1 = arith.constant 0 : i32
    return %c0_i32, %c0_i32_0 : i32, i32
  }
  func.func @transform_11(%arg0: i32) -> (i32, i32) {
    %c0_i32 = arith.constant 0 : i32
    %c0_i32_0 = arith.constant 0 : i32
    return %arg0, %c0_i32 : i32, i32
  }
}

</mosaic_0001>

<llo_original>
// kernel: propagator_forward.1
$region0: #{propagator_forward.1}
  #allocation0 [shape = 'u32[]', space=smem, size = 0x4, offset = 0x4, fixed_abs, tag = 'smem constant byte address 0x4 - core index']
  #allocation1 [shape = 'u32[144,128]{1,0:T(1,128)}', space=vmem, size = 0x12000, scoped, tag = 'internal scratch']
  %s0 = inlined_call_operand.vmem [shape: f32[4,8,16], index: 0, kind: input, shape index: {}]
  %s1 = inlined_call_operand.vmem [shape: f32[4,8,16], index: 1, kind: input, shape index: {}]
  %s2 = inlined_call_operand.vmem [shape: f32[4,16,32], index: 2, kind: input, shape index: {}]
  %s3 = inlined_call_operand.vmem [shape: f32[4,16,32], index: 3, kind: input, shape index: {}]
  %s4 = inlined_call_operand.vmem [shape: f32[32,32], index: 4, kind: input, shape index: {}]
  %s5 = inlined_call_operand.vmem [shape: f32[3,32,32], index: 5, kind: input, shape index: {}]
  %s6 = inlined_call_operand.vmem [shape: f32[3,32,32], index: 6, kind: input, shape index: {}]
  %s7 = inlined_call_operand.vmem [shape: f32[3,32,32], index: 7, kind: input, shape index: {}]
  %s8 = inlined_call_operand.vmem [shape: f32[1,32], index: 8, kind: input, shape index: {}]
  %s9 = inlined_call_operand.vmem [shape: f32[1,32], index: 9, kind: input, shape index: {}]
  %s10 = inlined_call_operand.vmem [shape: f32[1,32], index: 10, kind: input, shape index: {}]
  %s11 = inlined_call_operand.hbm [shape: f32[32,32], index: 11, kind: output, shape index: {}]
  %s12 = sld [smem:[#allocation0]]
  $region77: #{propagator_forward.1} parent=0
    _
  %s14 = ssub.s32 1, %s12
  %s15 = scalar_select 0, %s14, %s12
  $region1: #{propagator_forward.1} parent=0
    #allocation2 [shape = 'u8[16384]{0}', space=vmem, size = 0x4000, scoped, tag = 'output window, operand 0']
    #allocation3 [shape = 's32[2]{0}', space=sflag, size = 0x8, scoped, tag = 'scoped memory for propagator_forward.1']
    %16 = vsyncpa [#allocation3], 0
    %s17 = scalar_lea.sflag [#allocation3], 1
    %18 = vsyncpa %s17, 0
    loop: start=0, step=1, limit=4
    $region2: #{propagator_forward.1} parent=1 // loop_pre_header
      _
    $region3: #{propagator_forward.1} parent=1 // loop_header
      %s20 = sphi 0, %s24
      %p21 = scmp.ge.s32.totalorder %s20, 4
      %s30 = sphi 0, %s32
      %s33 = sphi 0, %s30
      %s34 = sphi 0, %s33
      %s50 = sphi 0, %s34
      %s56 = sphi 0, %s58
      %s59 = sphi 0, %s56
      %s60 = sphi 0, %s59
      %s76 = sphi 0, %s60
      %s82 = sphi 0, %s84
      %s85 = sphi 0, %s82
      %s86 = sphi 0, %s85
      %s102 = sphi 0, %s86
      %s108 = sphi 0, %s110
      %s111 = sphi 0, %s108
      %s112 = sphi 0, %s111
      %s128 = sphi 0, %s112
      %s134 = sphi 0, %s136
      %s137 = sphi 0, %s134
      %s138 = sphi 0, %s137
      %s154 = sphi 0, %s138
      %s158 = sphi 0, %s158
      %s160 = sphi 0, %s158
      %s161 = sphi 0, %s160
      %s175 = sphi 0, %s161
      %s179 = sphi 0, %s179
      %s181 = sphi 0, %s179
      %s182 = sphi 0, %s181
      %s196 = sphi 0, %s182
      %s200 = sphi 0, %s200
      %s202 = sphi 0, %s200
      %s203 = sphi 0, %s202
      %s217 = sphi 0, %s203
      %s221 = sphi 0, %s221
      %s223 = sphi 0, %s221
      %s224 = sphi 0, %s223
      %s238 = sphi 0, %s224
      %s242 = sphi 0, %s242
      %s244 = sphi 0, %s242
      %s245 = sphi 0, %s244
      %s259 = sphi 0, %s245
      %s263 = sphi 0, %s263
      %s265 = sphi 0, %s263
      %s266 = sphi 0, %s265
      %s280 = sphi 0, %s266
      %s286 = sphi 0, %s288
      %s289 = sphi 0, %s286
      %s290 = sphi 0, %s289
      %s306 = sphi 0, %s290
    $region4: #{propagator_forward.1} parent=1 // loop_header_branch
      %23 = sbr.rel (%p21) target = $region8
    $region5: #{propagator_forward.1} parent=1 // loop_body
      %s25 = ssub.s32 %s20, 1
      %s26 = ssub.s32 %s20, 2
      %s27 = sadd.s32 %s20, 1
      %s28 = ssub.s32 %s20, %s27
      %p29 = scmp.eq.s32.totalorder %s28, 0
      %s31 = sadd.s32 %s30, 1
      %s32 = scalar_select %p29, %s30, %s31
      %p35 = pneg %p29
      %p36 = scmp.eq.s32.totalorder %s20, 1
      %p37 = por %p35, %p36
      %p38 = scmp.ne.s32.totalorder %s30, %s33
      %p39 = scmp.eq.s32.totalorder %s20, 0
      %p40 = por %p38, %p39
      %p41 = scmp.ne.s32.totalorder %s30, %s33
      %p42 = scmp.eq.s32.totalorder %s25, 1
      %p43 = por %p41, %p42
      %p44 = scmp.ne.s32.totalorder %s33, %s34
      %p45 = scmp.eq.s32.totalorder %s25, 0
      %p46 = por %p44, %p45
      %p47 = scmp.ne.s32.totalorder %s33, %s34
      %p48 = scmp.eq.s32.totalorder %s26, 1
      %p49 = por %p47, %p48
      %p51 = scmp.ne.s32.totalorder %s34, %s50
      %p52 = scmp.eq.s32.totalorder %s26, 0
      %p53 = por %p51, %p52
      %s54 = ssub.s32 %s20, %s27
      %p55 = scmp.eq.s32.totalorder %s54, 0
      %s57 = sadd.s32 %s56, 1
      %s58 = scalar_select %p55, %s56, %s57
      %p61 = pneg %p55
      %p62 = scmp.eq.s32.totalorder %s20, 1
      %p63 = por %p61, %p62
      %p64 = scmp.ne.s32.totalorder %s56, %s59
      %p65 = scmp.eq.s32.totalorder %s20, 0
      %p66 = por %p64, %p65
      %p67 = scmp.ne.s32.totalorder %s56, %s59
      %p68 = scmp.eq.s32.totalorder %s25, 1
      %p69 = por %p67, %p68
      %p70 = scmp.ne.s32.totalorder %s59, %s60
      %p71 = scmp.eq.s32.totalorder %s25, 0
      %p72 = por %p70, %p71
      %p73 = scmp.ne.s32.totalorder %s59, %s60
      %p74 = scmp.eq.s32.totalorder %s26, 1
      %p75 = por %p73, %p74
      %p77 = scmp.ne.s32.totalorder %s60, %s76
      %p78 = scmp.eq.s32.totalorder %s26, 0
      %p79 = por %p77, %p78
      %s80 = ssub.s32 %s20, %s27
      %p81 = scmp.eq.s32.totalorder %s80, 0
      %s83 = sadd.s32 %s82, 1
      %s84 = scalar_select %p81, %s82, %s83
      %p87 = pneg %p81
      %p88 = scmp.eq.s32.totalorder %s20, 1
      %p89 = por %p87, %p88
      %p90 = scmp.ne.s32.totalorder %s82, %s85
      %p91 = scmp.eq.s32.totalorder %s20, 0
      %p92 = por %p90, %p91
      %p93 = scmp.ne.s32.totalorder %s82, %s85
      %p94 = scmp.eq.s32.totalorder %s25, 1
      %p95 = por %p93, %p94
      %p96 = scmp.ne.s32.totalorder %s85, %s86
      %p97 = scmp.eq.s32.totalorder %s25, 0
      %p98 = por %p96, %p97
      %p99 = scmp.ne.s32.totalorder %s85, %s86
      %p100 = scmp.eq.s32.totalorder %s26, 1
      %p101 = por %p99, %p100
      %p103 = scmp.ne.s32.totalorder %s86, %s102
      %p104 = scmp.eq.s32.totalorder %s26, 0
      %p105 = por %p103, %p104
      %s106 = ssub.s32 %s20, %s27
      %p107 = scmp.eq.s32.totalorder %s106, 0
      %s109 = sadd.s32 %s108, 1
      %s110 = scalar_select %p107, %s108, %s109
      %p113 = pneg %p107
      %p114 = scmp.eq.s32.totalorder %s20, 1
      %p115 = por %p113, %p114
      %p116 = scmp.ne.s32.totalorder %s108, %s111
      %p117 = scmp.eq.s32.totalorder %s20, 0
      %p118 = por %p116, %p117
      %p119 = scmp.ne.s32.totalorder %s108, %s111
      %p120 = scmp.eq.s32.totalorder %s25, 1
      %p121 = por %p119, %p120
      %p122 = scmp.ne.s32.totalorder %s111, %s112
      %p123 = scmp.eq.s32.totalorder %s25, 0
      %p124 = por %p122, %p123
      %p125 = scmp.ne.s32.totalorder %s111, %s112
      %p126 = scmp.eq.s32.totalorder %s26, 1
      %p127 = por %p125, %p126
      %p129 = scmp.ne.s32.totalorder %s112, %s128
      %p130 = scmp.eq.s32.totalorder %s26, 0
      %p131 = por %p129, %p130
      %s132 = ssub.s32 %s20, %s27
      %p133 = scmp.eq.s32.totalorder %s132, 0
      %s135 = sadd.s32 %s134, 1
      %s136 = scalar_select %p133, %s134, %s135
      %p139 = pneg %p133
      %p140 = scmp.eq.s32.totalorder %s20, 1
      %p141 = por %p139, %p140
      %p142 = scmp.ne.s32.totalorder %s134, %s137
      %p143 = scmp.eq.s32.totalorder %s20, 0
      %p144 = por %p142, %p143
      %p145 = scmp.ne.s32.totalorder %s134, %s137
      %p146 = scmp.eq.s32.totalorder %s25, 1
      %p147 = por %p145, %p146
      %p148 = scmp.ne.s32.totalorder %s137, %s138
      %p149 = scmp.eq.s32.totalorder %s25, 0
      %p150 = por %p148, %p149
      %p151 = scmp.ne.s32.totalorder %s137, %s138
      %p152 = scmp.eq.s32.totalorder %s26, 1
      %p153 = por %p151, %p152
      %p155 = scmp.ne.s32.totalorder %s138, %s154
      %p156 = scmp.eq.s32.totalorder %s26, 0
      %p157 = por %p155, %p156
      %s159 = sadd.s32 %s158, 1
      %p162 = scmp.eq.s32.totalorder %s20, 1
      %p163 = scmp.ne.s32.totalorder %s158, %s160
      %p164 = scmp.eq.s32.totalorder %s20, 0
      %p165 = por %p163, %p164
      %p166 = scmp.ne.s32.totalorder %s158, %s160
      %p167 = scmp.eq.s32.totalorder %s25, 1
      %p168 = por %p166, %p167
      %p169 = scmp.ne.s32.totalorder %s160, %s161
      %p170 = scmp.eq.s32.totalorder %s25, 0
      %p171 = por %p169, %p170
      %p172 = scmp.ne.s32.totalorder %s160, %s161
      %p173 = scmp.eq.s32.totalorder %s26, 1
      %p174 = por %p172, %p173
      %p176 = scmp.ne.s32.totalorder %s161, %s175
      %p177 = scmp.eq.s32.totalorder %s26, 0
      %p178 = por %p176, %p177
      %s180 = sadd.s32 %s179, 1
      %p183 = scmp.eq.s32.totalorder %s20, 1
      %p184 = scmp.ne.s32.totalorder %s179, %s181
      %p185 = scmp.eq.s32.totalorder %s20, 0
      %p186 = por %p184, %p185
      %p187 = scmp.ne.s32.totalorder %s179, %s181
      %p188 = scmp.eq.s32.totalorder %s25, 1
      %p189 = por %p187, %p188
      %p190 = scmp.ne.s32.totalorder %s181, %s182
      %p191 = scmp.eq.s32.totalorder %s25, 0
      %p192 = por %p190, %p191
      %p193 = scmp.ne.s32.totalorder %s181, %s182
      %p194 = scmp.eq.s32.totalorder %s26, 1
      %p195 = por %p193, %p194
      %p197 = scmp.ne.s32.totalorder %s182, %s196
      %p198 = scmp.eq.s32.totalorder %s26, 0
      %p199 = por %p197, %p198
      %s201 = sadd.s32 %s200, 1
      %p204 = scmp.eq.s32.totalorder %s20, 1
      %p205 = scmp.ne.s32.totalorder %s200, %s202
      %p206 = scmp.eq.s32.totalorder %s20, 0
      %p207 = por %p205, %p206
      %p208 = scmp.ne.s32.totalorder %s200, %s202
      %p209 = scmp.eq.s32.totalorder %s25, 1
      %p210 = por %p208, %p209
      %p211 = scmp.ne.s32.totalorder %s202, %s203
      %p212 = scmp.eq.s32.totalorder %s25, 0
      %p213 = por %p211, %p212
      %p214 = scmp.ne.s32.totalorder %s202, %s203
      %p215 = scmp.eq.s32.totalorder %s26, 1
      %p216 = por %p214, %p215
      %p218 = scmp.ne.s32.totalorder %s203, %s217
      %p219 = scmp.eq.s32.totalorder %s26, 0
      %p220 = por %p218, %p219
      %s222 = sadd.s32 %s221, 1
      %p225 = scmp.eq.s32.totalorder %s20, 1
      %p226 = scmp.ne.s32.totalorder %s221, %s223
      %p227 = scmp.eq.s32.totalorder %s20, 0
      %p228 = por %p226, %p227
      %p229 = scmp.ne.s32.totalorder %s221, %s223
      %p230 = scmp.eq.s32.totalorder %s25, 1
      %p231 = por %p229, %p230
      %p232 = scmp.ne.s32.totalorder %s223, %s224
      %p233 = scmp.eq.s32.totalorder %s25, 0
      %p234 = por %p232, %p233
      %p235 = scmp.ne.s32.totalorder %s223, %s224
      %p236 = scmp.eq.s32.totalorder %s26, 1
      %p237 = por %p235, %p236
      %p239 = scmp.ne.s32.totalorder %s224, %s238
      %p240 = scmp.eq.s32.totalorder %s26, 0
      %p241 = por %p239, %p240
      %s243 = sadd.s32 %s242, 1
      %p246 = scmp.eq.s32.totalorder %s20, 1
      %p247 = scmp.ne.s32.totalorder %s242, %s244
      %p248 = scmp.eq.s32.totalorder %s20, 0
      %p249 = por %p247, %p248
      %p250 = scmp.ne.s32.totalorder %s242, %s244
      %p251 = scmp.eq.s32.totalorder %s25, 1
      %p252 = por %p250, %p251
      %p253 = scmp.ne.s32.totalorder %s244, %s245
      %p254 = scmp.eq.s32.totalorder %s25, 0
      %p255 = por %p253, %p254
      %p256 = scmp.ne.s32.totalorder %s244, %s245
      %p257 = scmp.eq.s32.totalorder %s26, 1
      %p258 = por %p256, %p257
      %p260 = scmp.ne.s32.totalorder %s245, %s259
      %p261 = scmp.eq.s32.totalorder %s26, 0
      %p262 = por %p260, %p261
      %s264 = sadd.s32 %s263, 1
      %p267 = scmp.eq.s32.totalorder %s20, 1
      %p268 = scmp.ne.s32.totalorder %s263, %s265
      %p269 = scmp.eq.s32.totalorder %s20, 0
      %p270 = por %p268, %p269
      %p271 = scmp.ne.s32.totalorder %s263, %s265
      %p272 = scmp.eq.s32.totalorder %s25, 1
      %p273 = por %p271, %p272
      %p274 = scmp.ne.s32.totalorder %s265, %s266
      %p275 = scmp.eq.s32.totalorder %s25, 0
      %p276 = por %p274, %p275
      %p277 = scmp.ne.s32.totalorder %s265, %s266
      %p278 = scmp.eq.s32.totalorder %s26, 1
      %p279 = por %p277, %p278
      %p281 = scmp.ne.s32.totalorder %s266, %s280
      %p282 = scmp.eq.s32.totalorder %s26, 0
      %p283 = por %p281, %p282
      %s284 = ssub.s32 %s20, %s27
      %p285 = scmp.eq.s32.totalorder %s284, 0
      %s287 = sadd.s32 %s286, 1
      %s288 = scalar_select %p285, %s286, %s287
      %p291 = pneg %p285
      %p292 = scmp.eq.s32.totalorder %s20, 1
      %p293 = por %p291, %p292
      %p294 = scmp.ne.s32.totalorder %s286, %s289
      %p295 = scmp.eq.s32.totalorder %s20, 0
      %p296 = por %p294, %p295
      %p297 = scmp.ne.s32.totalorder %s286, %s289
      %p298 = scmp.eq.s32.totalorder %s25, 1
      %p299 = por %p297, %p298
      %p300 = scmp.ne.s32.totalorder %s289, %s290
      %p301 = scmp.eq.s32.totalorder %s25, 0
      %p302 = por %p300, %p301
      %p303 = scmp.ne.s32.totalorder %s289, %s290
      %p304 = scmp.eq.s32.totalorder %s26, 1
      %p305 = por %p303, %p304
      %p307 = scmp.ne.s32.totalorder %s290, %s306
      %p308 = scmp.eq.s32.totalorder %s26, 0
      %p309 = por %p307, %p308
      %p310 = scmp.le.s32.totalorder 1, %s20
      %p311 = scmp.lt.s32.totalorder %s20, 3
      %p312 = pnand %p310, %p311
      %p313 = pneg %p312
      // Predicated region
      $region9: #{propagator_forward.1} parent=5 // pred_check
        _
      $region10: #{propagator_forward.1} parent=5 // pred_check_branch
        %315 = sbr.rel (%p312) target = $region12
      $region11: #{propagator_forward.1} parent=5 // pred_region
        %s316 = ssub.s32 %s20, 1
        // Predicated region
        $region13: #{propagator_forward.1} parent=11 // pred_check
          %p317 = pneg %p171
        $region14: #{propagator_forward.1} parent=11 // pred_check_branch
          %319 = sbr.rel (%p317) target = $region16
        $region15: #{propagator_forward.1} parent=11 // pred_region
          _
        $region16: #{propagator_forward.1} parent=11 // pred_fallthru
          _
        // Predicated region
        $region17: #{propagator_forward.1} parent=11 // pred_check
          %p320 = pneg %p192
        $region18: #{propagator_forward.1} parent=11 // pred_check_branch
          %322 = sbr.rel (%p320) target = $region20
        $region19: #{propagator_forward.1} parent=11 // pred_region
          _
        $region20: #{propagator_forward.1} parent=11 // pred_fallthru
          _
        // Predicated region
        $region21: #{propagator_forward.1} parent=11 // pred_check
          %p323 = pneg %p213
        $region22: #{propagator_forward.1} parent=11 // pred_check_branch
          %325 = sbr.rel (%p323) target = $region24
        $region23: #{propagator_forward.1} parent=11 // pred_region
          _
        $region24: #{propagator_forward.1} parent=11 // pred_fallthru
          _
        // Predicated region
        $region25: #{propagator_forward.1} parent=11 // pred_check
          %p326 = pneg %p234
        $region26: #{propagator_forward.1} parent=11 // pred_check_branch
          %328 = sbr.rel (%p326) target = $region28
        $region27: #{propagator_forward.1} parent=11 // pred_region
          _
        $region28: #{propagator_forward.1} parent=11 // pred_fallthru
          _
        // Predicated region
        $region29: #{propagator_forward.1} parent=11 // pred_check
          %p329 = pneg %p255
        $region30: #{propagator_forward.1} parent=11 // pred_check_branch
          %331 = sbr.rel (%p329) target = $region32
        $region31: #{propagator_forward.1} parent=11 // pred_region
          _
        $region32: #{propagator_forward.1} parent=11 // pred_fallthru
          _
        // Predicated region
        $region33: #{propagator_forward.1} parent=11 // pred_check
          %p332 = pneg %p276
        $region34: #{propagator_forward.1} parent=11 // pred_check_branch
          %334 = sbr.rel (%p332) target = $region36
        $region35: #{propagator_forward.1} parent=11 // pred_region
          _
        $region36: #{propagator_forward.1} parent=11 // pred_fallthru
          _
      $region12: #{propagator_forward.1} parent=5 // pred_fallthru
        _
      %p335 = scmp.lt.s32.totalorder %s20, 2
      // Predicated region
      $region37: #{propagator_forward.1} parent=5 // pred_check
        %p336 = pneg %p335
      $region38: #{propagator_forward.1} parent=5 // pred_check_branch
        %338 = sbr.rel (%p336) target = $region40
      $region39: #{propagator_forward.1} parent=5 // pred_region
        // Predicated region
        $region41: #{propagator_forward.1} parent=39 // pred_check
          %p339 = pneg %p40
        $region42: #{propagator_forward.1} parent=39 // pred_check_branch
          %341 = sbr.rel (%p339) target = $region44
        $region43: #{propagator_forward.1} parent=39 // pred_region
          %s342 = smul.u32 2, %s20
          %p343 = scmp.lt.s32.totalorder %s342, 3
          %s344 = scalar_select %p343, %s342, 3
          %s345 = smul.addr %s344, 8
          %s346 = scalar_lea.vmem %s0, %s345
          %s347 = smul.u32 2, %s20
        $region44: #{propagator_forward.1} parent=39 // pred_fallthru
          _
        // Predicated region
        $region45: #{propagator_forward.1} parent=39 // pred_check
          %p348 = pneg %p66
        $region46: #{propagator_forward.1} parent=39 // pred_check_branch
          %350 = sbr.rel (%p348) target = $region48
        $region47: #{propagator_forward.1} parent=39 // pred_region
          %s351 = smul.u32 2, %s20
          %p352 = scmp.lt.s32.totalorder %s351, 3
          %s353 = scalar_select %p352, %s351, 3
          %s354 = smul.addr %s353, 8
          %s355 = scalar_lea.vmem %s1, %s354
          %s356 = smul.u32 2, %s20
        $region48: #{propagator_forward.1} parent=39 // pred_fallthru
          _
        // Predicated region
        $region49: #{propagator_forward.1} parent=39 // pred_check
          %p357 = pneg %p92
        $region50: #{propagator_forward.1} parent=39 // pred_check_branch
          %359 = sbr.rel (%p357) target = $region52
        $region51: #{propagator_forward.1} parent=39 // pred_region
          %s360 = smul.u32 2, %s20
          %p361 = scmp.lt.s32.totalorder %s360, 3
          %s362 = scalar_select %p361, %s360, 3
          %s363 = smul.addr %s362, 2
          %s364 = smul.addr %s363, 8
          %s365 = scalar_lea.vmem %s2, %s364
          %s366 = smul.u32 2, %s20
        $region52: #{propagator_forward.1} parent=39 // pred_fallthru
          _
        // Predicated region
        $region53: #{propagator_forward.1} parent=39 // pred_check
          %p367 = pneg %p118
        $region54: #{propagator_forward.1} parent=39 // pred_check_branch
          %369 = sbr.rel (%p367) target = $region56
        $region55: #{propagator_forward.1} parent=39 // pred_region
          %s370 = smul.u32 2, %s20
          %p371 = scmp.lt.s32.totalorder %s370, 3
          %s372 = scalar_select %p371, %s370, 3
          %s373 = smul.addr %s372, 2
          %s374 = smul.addr %s373, 8
          %s375 = scalar_lea.vmem %s3, %s374
          %s376 = smul.u32 2, %s20
        $region56: #{propagator_forward.1} parent=39 // pred_fallthru
          _
        // Predicated region
        $region57: #{propagator_forward.1} parent=39 // pred_check
          %p377 = pneg %p144
        $region58: #{propagator_forward.1} parent=39 // pred_check_branch
          %379 = sbr.rel (%p377) target = $region60
        $region59: #{propagator_forward.1} parent=39 // pred_region
          %s380 = smul.u32 2, %s20
          %p381 = scmp.lt.s32.totalorder %s380, 3
          %s382 = scalar_select %p381, %s380, 3
          %s383 = smul.addr %s382, 8
          %s384 = scalar_lea.vmem %s4, %s383
          %s385 = smul.u32 2, %s20
        $region60: #{propagator_forward.1} parent=39 // pred_fallthru
          _
      $region40: #{propagator_forward.1} parent=5 // pred_fallthru
        _
      %p386 = scmp.le.s32.totalorder 1, %s20
      %p387 = scmp.lt.s32.totalorder %s20, 3
      %p388 = pnand %p386, %p387
      %p389 = pneg %p388
      // Predicated region
      $region61: #{propagator_forward.1} parent=5 // pred_check
        _
      $region62: #{propagator_forward.1} parent=5 // pred_check_branch
        %391 = sbr.rel (%p388) target = $region64
      $region63: #{propagator_forward.1} parent=5 // pred_region
        %s392 = ssub.s32 %s20, 1
        %s393 = smul.u32 2, %s25
        %p394 = scmp.lt.s32.totalorder %s393, 3
        %s395 = scalar_select %p394, %s393, 3
        %s396 = smul.addr %s395, 8
        %s397 = scalar_lea.vmem %s0, %s396
        %p398 = pneg %p46
        %p399 = pneg %p43
        %s400 = smul.u32 2, %s25
        %p401 = scmp.lt.s32.totalorder %s400, 3
        %s402 = scalar_select %p401, %s400, 3
        %s403 = smul.addr %s402, 8
        %s404 = scalar_lea.vmem %s1, %s403
        %p405 = pneg %p72
        %p406 = pneg %p69
        %s407 = smul.u32 2, %s25
        %p408 = scmp.lt.s32.totalorder %s407, 3
        %s409 = scalar_select %p408, %s407, 3
        %s410 = smul.addr %s409, 2
        %s411 = smul.addr %s410, 8
        %s412 = scalar_lea.vmem %s2, %s411
        %p413 = pneg %p98
        %p414 = pneg %p95
        %s415 = smul.u32 2, %s25
        %p416 = scmp.lt.s32.totalorder %s415, 3
        %s417 = scalar_select %p416, %s415, 3
        %s418 = smul.addr %s417, 2
        %s419 = smul.addr %s418, 8
        %s420 = scalar_lea.vmem %s3, %s419
        %p421 = pneg %p124
        %p422 = pneg %p121
        %s423 = smul.u32 2, %s25
        %p424 = scmp.lt.s32.totalorder %s423, 3
        %s425 = scalar_select %p424, %s423, 3
        %s426 = smul.addr %s425, 8
        %s427 = scalar_lea.vmem %s4, %s426
        %p428 = pneg %p150
        %p429 = pneg %p147
        %p430 = pneg %p171
        %p431 = pneg %p168
        %p432 = pneg %p192
        %p433 = pneg %p189
        %p434 = pneg %p213
        %p435 = pneg %p210
        %p436 = pneg %p234
        %p437 = pneg %p231
        %p438 = pneg %p255
        %p439 = pneg %p252
        %p440 = pneg %p276
        %p441 = pneg %p273
        %p442 = pneg %p302
        %p443 = pneg %p299
        %s444 = sand.u32 %s289, 1
        %s445 = scalar_lea.sflag [#allocation3], %s444
        %s446 = sand.u32 %s289, 1
        %s447 = smul.addr %s446, 16
        %s448 = scalar_lea.vmem [#allocation2], %s447
        %s449 = smul.u32 2, %s25
        %p450 = scmp.lt.s32.totalorder %s449, 3
        %s451 = scalar_select %p450, %s449, 3
        %s452 = smul.addr %s451, 8
        %s453 = scalar_lea.vmem %s0, %s452
        %s454 = smul.u32 2, %s25
        %s455 = smul.u32 2, %s25
        %p456 = scmp.lt.s32.totalorder %s455, 3
        %s457 = scalar_select %p456, %s455, 3
        %s458 = smul.addr %s457, 8
        %s459 = scalar_lea.vmem %s1, %s458
        %s460 = smul.u32 2, %s25
        %s461 = smul.u32 2, %s25
        %p462 = scmp.lt.s32.totalorder %s461, 3
        %s463 = scalar_select %p462, %s461, 3
        %s464 = smul.addr %s463, 2
        %s465 = smul.addr %s464, 8
        %s466 = scalar_lea.vmem %s2, %s465
        %s467 = smul.u32 2, %s25
        %s468 = smul.u32 2, %s25
        %p469 = scmp.lt.s32.totalorder %s468, 3
        %s470 = scalar_select %p469, %s468, 3
        %s471 = smul.addr %s470, 2
        %s472 = smul.addr %s471, 8
        %s473 = scalar_lea.vmem %s3, %s472
        %s474 = smul.u32 2, %s25
        %s475 = smul.u32 2, %s25
        %p476 = scmp.lt.s32.totalorder %s475, 3
        %s477 = scalar_select %p476, %s475, 3
        %s478 = smul.addr %s477, 8
        %s479 = scalar_lea.vmem %s4, %s478
        %s480 = smul.u32 2, %s25
        %s481 = smul.u32 2, %s25
        %v482 = vld [vmem:[%s453] sm:$0xff]
        %v483 = vld [vmem:[%s453 + $0x8] sm:$0xff]
        %v484 = vld [vmem:[%s466] sm:$0xff]
        %v485 = vld [vmem:[%s466 + $0x8] sm:$0xff]
        %v486 = vld [vmem:[%s466 + $0x10] sm:$0xff]
        %v487 = vld [vmem:[%s466 + $0x18] sm:$0xff]
        %vm488 = vcmask 130048
        %v490 = vsel %vm488, %v482, 0
        %492 = vmatprep.subr.mxu0 0.0
        %493 = vmatpush1.msra.mxu0 %v484
        %494 = vmatprep.subr.mxu0 0.0
        %495 = vmatpush1.msra.mxu0 %v485
        %496 = vmatprep.subr.mxu0 0.0
        %497 = vmatpush1.msra.mxu0 0.0
        %498 = vmatprep.subr.mxu0 0.0
        %499 = vmatpush1.msra.mxu0 0.0
        %500 = vmatprep.subr.mxu0 0.0
        %501 = vmatpush1.msra.mxu0 0.0
        %502 = vmatprep.subr.mxu0 0.0
        %503 = vmatpush1.msra.mxu0 0.0
        %504 = vmatprep.subr.mxu0 0.0
        %505 = vmatpush1.msra.mxu0 0.0
        %506 = vmatprep.subr.mxu0 0.0
        %507 = vmatpush1.msra.mxu0 0.0
        %508 = vmatprep.subr.mxu0 0.0
        %509 = vmatpush1.msra.mxu0 0.0
        %510 = vmatprep.subr.mxu0 0.0
        %511 = vmatpush1.msra.mxu0 0.0
        %512 = vmatprep.subr.mxu0 0.0
        %513 = vmatpush1.msra.mxu0 0.0
        %514 = vmatprep.subr.mxu0 0.0
        %515 = vmatpush1.msra.mxu0 0.0
        %516 = vmatprep.subr.mxu0 0.0
        %517 = vmatpush1.msra.mxu0 0.0
        %518 = vmatprep.subr.mxu0 0.0
        %519 = vmatpush1.msra.mxu0 0.0
        %520 = vmatprep.subr.mxu0 0.0
        %521 = vmatpush1.msra.mxu0 0.0
        %522 = vmatprep.subr.mxu0 0.0
        %523 = vmatpush1.msra.mxu0 0.0
        %524 = vmatprep.subr.mxu0 0.0
        %525 = vmatpush1.msra.mxu0 0.0
        %526 = vmatprep.subr.mxu0 0.0
        %527 = vmatpush1.msra.mxu0 0.0
        %528 = vmatprep.subr.mxu0 0.0
        %529 = vmatpush1.msra.mxu0 0.0
        %530 = vmatprep.subr.mxu0 0.0
        %531 = vmatpush1.msra.mxu0 0.0
        %532 = vmatprep.subr.mxu0 0.0
        %533 = vmatpush1.msra.mxu0 0.0
        %534 = vmatprep.subr.mxu0 0.0
        %535 = vmatpush1.msra.mxu0 0.0
        %536 = vmatprep.subr.mxu0 0.0
        %537 = vmatpush1.msra.mxu0 0.0
        %538 = vmatprep.subr.mxu0 0.0
        %539 = vmatpush1.msra.mxu0 0.0
        %540 = vmatprep.subr.mxu0 0.0
        %541 = vmatpush1.msra.mxu0 0.0
        %542 = vmatprep.subr.mxu0 0.0
        %543 = vmatpush1.msra.mxu0 0.0
        %544 = vmatprep.subr.mxu0 0.0
        %545 = vmatpush1.msra.mxu0 0.0
        %546 = vmatprep.subr.mxu0 0.0
        %547 = vmatpush1.msra.mxu0 0.0
        %548 = vmatprep.subr.mxu0 0.0
        %549 = vmatpush1.msra.mxu0 0.0
        %550 = vmatprep.subr.mxu0 0.0
        %551 = vmatpush1.msra.mxu0 0.0
        %552 = vmatprep.subr.mxu0 0.0
        %553 = vmatpush1.msra.mxu0 0.0
        %554 = vmatprep.subr.mxu0 0.0
        %555 = vmatpush1.msra.mxu0 0.0
        %556 = vmatprep.mubr.f32.mxu0 0.0
        %557 = vmatmul.mubr.f32.gmra.mrb[0].mxu0 %v490
        %v558 = vpop.f32.mrb[0].mxu0
        %v559 = vadd.f32 0.0, %v558
        %v560 = vpop.f32.mrb[0].mxu0
        %561 = vdwg.mxu0
        %v563 = vsel %vm488, %v483, 0
        %565 = vmatprep.subr.mxu0 0.0
        %566 = vmatpush1.msra.mxu0 %v486
        %567 = vmatprep.subr.mxu0 0.0
        %568 = vmatpush1.msra.mxu0 %v487
        %569 = vmatprep.subr.mxu0 0.0
        %570 = vmatpush1.msra.mxu0 0.0
        %571 = vmatprep.subr.mxu0 0.0
        %572 = vmatpush1.msra.mxu0 0.0
        %573 = vmatprep.subr.mxu0 0.0
        %574 = vmatpush1.msra.mxu0 0.0
        %575 = vmatprep.subr.mxu0 0.0
        %576 = vmatpush1.msra.mxu0 0.0
        %577 = vmatprep.subr.mxu0 0.0
        %578 = vmatpush1.msra.mxu0 0.0
        %579 = vmatprep.subr.mxu0 0.0
        %580 = vmatpush1.msra.mxu0 0.0
        %581 = vmatprep.subr.mxu0 0.0
        %582 = vmatpush1.msra.mxu0 0.0
        %583 = vmatprep.subr.mxu0 0.0
        %584 = vmatpush1.msra.mxu0 0.0
        %585 = vmatprep.subr.mxu0 0.0
        %586 = vmatpush1.msra.mxu0 0.0
        %587 = vmatprep.subr.mxu0 0.0
        %588 = vmatpush1.msra.mxu0 0.0
        %589 = vmatprep.subr.mxu0 0.0
        %590 = vmatpush1.msra.mxu0 0.0
        %591 = vmatprep.subr.mxu0 0.0
        %592 = vmatpush1.msra.mxu0 0.0
        %593 = vmatprep.subr.mxu0 0.0
        %594 = vmatpush1.msra.mxu0 0.0
        %595 = vmatprep.subr.mxu0 0.0
        %596 = vmatpush1.msra.mxu0 0.0
        %597 = vmatprep.subr.mxu0 0.0
        %598 = vmatpush1.msra.mxu0 0.0
        %599 = vmatprep.subr.mxu0 0.0
        %600 = vmatpush1.msra.mxu0 0.0
        %601 = vmatprep.subr.mxu0 0.0
        %602 = vmatpush1.msra.mxu0 0.0
        %603 = vmatprep.subr.mxu0 0.0
        %604 = vmatpush1.msra.mxu0 0.0
        %605 = vmatprep.subr.mxu0 0.0
        %606 = vmatpush1.msra.mxu0 0.0
        %607 = vmatprep.subr.mxu0 0.0
        %608 = vmatpush1.msra.mxu0 0.0
        %609 = vmatprep.subr.mxu0 0.0
        %610 = vmatpush1.msra.mxu0 0.0
        %611 = vmatprep.subr.mxu0 0.0
        %612 = vmatpush1.msra.mxu0 0.0
        %613 = vmatprep.subr.mxu0 0.0
        %614 = vmatpush1.msra.mxu0 0.0
        %615 = vmatprep.subr.mxu0 0.0
        %616 = vmatpush1.msra.mxu0 0.0
        %617 = vmatprep.subr.mxu0 0.0
        %618 = vmatpush1.msra.mxu0 0.0
        %619 = vmatprep.subr.mxu0 0.0
        %620 = vmatpush1.msra.mxu0 0.0
        %621 = vmatprep.subr.mxu0 0.0
        %622 = vmatpush1.msra.mxu0 0.0
        %623 = vmatprep.subr.mxu0 0.0
        %624 = vmatpush1.msra.mxu0 0.0
        %625 = vmatprep.subr.mxu0 0.0
        %626 = vmatpush1.msra.mxu0 0.0
        %627 = vmatprep.subr.mxu0 0.0
        %628 = vmatpush1.msra.mxu0 0.0
        %629 = vmatprep.mubr.f32.mxu0 0.0
        %630 = vmatmul.mubr.f32.gmra.mrb[0].mxu0 %v563
        %v631 = vpop.f32.mrb[0].mxu0
        %v632 = vadd.f32 0.0, %v631
        %v633 = vpop.f32.mrb[0].mxu0
        %634 = vdwg.mxu0
        %v635 = vld [vmem:[%s459] sm:$0xff]
        %v636 = vld [vmem:[%s459 + $0x8] sm:$0xff]
        %v637 = vld [vmem:[%s473] sm:$0xff]
        %v638 = vld [vmem:[%s473 + $0x8] sm:$0xff]
        %v639 = vld [vmem:[%s473 + $0x10] sm:$0xff]
        %v640 = vld [vmem:[%s473 + $0x18] sm:$0xff]
        %v642 = vsel %vm488, %v635, 0
        %644 = vmatprep.subr.mxu0 0.0
        %645 = vmatpush1.msra.mxu0 %v637
        %646 = vmatprep.subr.mxu0 0.0
        %647 = vmatpush1.msra.mxu0 %v638
        %648 = vmatprep.subr.mxu0 0.0
        %649 = vmatpush1.msra.mxu0 0.0
        %650 = vmatprep.subr.mxu0 0.0
        %651 = vmatpush1.msra.mxu0 0.0
        %652 = vmatprep.subr.mxu0 0.0
        %653 = vmatpush1.msra.mxu0 0.0
        %654 = vmatprep.subr.mxu0 0.0
        %655 = vmatpush1.msra.mxu0 0.0
        %656 = vmatprep.subr.mxu0 0.0
        %657 = vmatpush1.msra.mxu0 0.0
        %658 = vmatprep.subr.mxu0 0.0
        %659 = vmatpush1.msra.mxu0 0.0
        %660 = vmatprep.subr.mxu0 0.0
        %661 = vmatpush1.msra.mxu0 0.0
        %662 = vmatprep.subr.mxu0 0.0
        %663 = vmatpush1.msra.mxu0 0.0
        %664 = vmatprep.subr.mxu0 0.0
        %665 = vmatpush1.msra.mxu0 0.0
        %666 = vmatprep.subr.mxu0 0.0
        %667 = vmatpush1.msra.mxu0 0.0
        %668 = vmatprep.subr.mxu0 0.0
        %669 = vmatpush1.msra.mxu0 0.0
        %670 = vmatprep.subr.mxu0 0.0
        %671 = vmatpush1.msra.mxu0 0.0
        %672 = vmatprep.subr.mxu0 0.0
        %673 = vmatpush1.msra.mxu0 0.0
        %674 = vmatprep.subr.mxu0 0.0
        %675 = vmatpush1.msra.mxu0 0.0
        %676 = vmatprep.subr.mxu0 0.0
        %677 = vmatpush1.msra.mxu0 0.0
        %678 = vmatprep.subr.mxu0 0.0
        %679 = vmatpush1.msra.mxu0 0.0
        %680 = vmatprep.subr.mxu0 0.0
        %681 = vmatpush1.msra.mxu0 0.0
        %682 = vmatprep.subr.mxu0 0.0
        %683 = vmatpush1.msra.mxu0 0.0
        %684 = vmatprep.subr.mxu0 0.0
        %685 = vmatpush1.msra.mxu0 0.0
        %686 = vmatprep.subr.mxu0 0.0
        %687 = vmatpush1.msra.mxu0 0.0
        %688 = vmatprep.subr.mxu0 0.0
        %689 = vmatpush1.msra.mxu0 0.0
        %690 = vmatprep.subr.mxu0 0.0
        %691 = vmatpush1.msra.mxu0 0.0
        %692 = vmatprep.subr.mxu0 0.0
        %693 = vmatpush1.msra.mxu0 0.0
        %694 = vmatprep.subr.mxu0 0.0
        %695 = vmatpush1.msra.mxu0 0.0
        %696 = vmatprep.subr.mxu0 0.0
        %697 = vmatpush1.msra.mxu0 0.0
        %698 = vmatprep.subr.mxu0 0.0
        %699 = vmatpush1.msra.mxu0 0.0
        %700 = vmatprep.subr.mxu0 0.0
        %701 = vmatpush1.msra.mxu0 0.0
        %702 = vmatprep.subr.mxu0 0.0
        %703 = vmatpush1.msra.mxu0 0.0
        %704 = vmatprep.subr.mxu0 0.0
        %705 = vmatpush1.msra.mxu0 0.0
        %706 = vmatprep.subr.mxu0 0.0
        %707 = vmatpush1.msra.mxu0 0.0
        %708 = vmatprep.mubr.f32.mxu0 0.0
        %709 = vmatmul.mubr.f32.gmra.mrb[0].mxu0 %v642
        %v710 = vpop.f32.mrb[0].mxu0
        %v711 = vadd.f32 0.0, %v710
        %v712 = vpop.f32.mrb[0].mxu0
        %713 = vdwg.mxu0
        %v715 = vsel %vm488, %v636, 0
        %717 = vmatprep.subr.mxu0 0.0
        %718 = vmatpush1.msra.mxu0 %v639
        %719 = vmatprep.subr.mxu0 0.0
        %720 = vmatpush1.msra.mxu0 %v640
        %721 = vmatprep.subr.mxu0 0.0
        %722 = vmatpush1.msra.mxu0 0.0
        %723 = vmatprep.subr.mxu0 0.0
        %724 = vmatpush1.msra.mxu0 0.0
        %725 = vmatprep.subr.mxu0 0.0
        %726 = vmatpush1.msra.mxu0 0.0
        %727 = vmatprep.subr.mxu0 0.0
        %728 = vmatpush1.msra.mxu0 0.0
        %729 = vmatprep.subr.mxu0 0.0
        %730 = vmatpush1.msra.mxu0 0.0
        %731 = vmatprep.subr.mxu0 0.0
        %732 = vmatpush1.msra.mxu0 0.0
        %733 = vmatprep.subr.mxu0 0.0
        %734 = vmatpush1.msra.mxu0 0.0
        %735 = vmatprep.subr.mxu0 0.0
        %736 = vmatpush1.msra.mxu0 0.0
        %737 = vmatprep.subr.mxu0 0.0
        %738 = vmatpush1.msra.mxu0 0.0
        %739 = vmatprep.subr.mxu0 0.0
        %740 = vmatpush1.msra.mxu0 0.0
        %741 = vmatprep.subr.mxu0 0.0
        %742 = vmatpush1.msra.mxu0 0.0
        %743 = vmatprep.subr.mxu0 0.0
        %744 = vmatpush1.msra.mxu0 0.0
        %745 = vmatprep.subr.mxu0 0.0
        %746 = vmatpush1.msra.mxu0 0.0
        %747 = vmatprep.subr.mxu0 0.0
        %748 = vmatpush1.msra.mxu0 0.0
        %749 = vmatprep.subr.mxu0 0.0
        %750 = vmatpush1.msra.mxu0 0.0
        %751 = vmatprep.subr.mxu0 0.0
        %752 = vmatpush1.msra.mxu0 0.0
        %753 = vmatprep.subr.mxu0 0.0
        %754 = vmatpush1.msra.mxu0 0.0
        %755 = vmatprep.subr.mxu0 0.0
        %756 = vmatpush1.msra.mxu0 0.0
        %757 = vmatprep.subr.mxu0 0.0
        %758 = vmatpush1.msra.mxu0 0.0
        %759 = vmatprep.subr.mxu0 0.0
        %760 = vmatpush1.msra.mxu0 0.0
        %761 = vmatprep.subr.mxu0 0.0
        %762 = vmatpush1.msra.mxu0 0.0
        %763 = vmatprep.subr.mxu0 0.0
        %764 = vmatpush1.msra.mxu0 0.0
        %765 = vmatprep.subr.mxu0 0.0
        %766 = vmatpush1.msra.mxu0 0.0
        %767 = vmatprep.subr.mxu0 0.0
        %768 = vmatpush1.msra.mxu0 0.0
        %769 = vmatprep.subr.mxu0 0.0
        %770 = vmatpush1.msra.mxu0 0.0
        %771 = vmatprep.subr.mxu0 0.0
        %772 = vmatpush1.msra.mxu0 0.0
        %773 = vmatprep.subr.mxu0 0.0
        %774 = vmatpush1.msra.mxu0 0.0
        %775 = vmatprep.subr.mxu0 0.0
        %776 = vmatpush1.msra.mxu0 0.0
        %777 = vmatprep.subr.mxu0 0.0
        %778 = vmatpush1.msra.mxu0 0.0
        %779 = vmatprep.subr.mxu0 0.0
        %780 = vmatpush1.msra.mxu0 0.0
        %781 = vmatprep.mubr.f32.mxu0 0.0
        %782 = vmatmul.mubr.f32.gmra.mrb[0].mxu0 %v715
        %v783 = vpop.f32.mrb[0].mxu0
        %v784 = vadd.f32 0.0, %v783
        %v785 = vpop.f32.mrb[0].mxu0
        %786 = vdwg.mxu0
        %v787 = vld [vmem:[%s479] sm:$0xff]
        %v788 = vld [vmem:[%s479 + $0x8] sm:$0xff]
        %v789 = vld [vmem:[%s5] sm:$0xff]
        %v790 = vld [vmem:[%s5 + $0x8] sm:$0xff]
        %v791 = vld [vmem:[%s5 + $0x10] sm:$0xff]
        %v792 = vld [vmem:[%s5 + $0x18] sm:$0xff]
        %s793 = scalar_lea.vmem %s5, 32
        %v794 = vld [vmem:[%s793] sm:$0xff]
        %v795 = vld [vmem:[%s793 + $0x8] sm:$0xff]
        %v796 = vld [vmem:[%s793 + $0x10] sm:$0xff]
        %v797 = vld [vmem:[%s793 + $0x18] sm:$0xff]
        %vm798 = vcmask 261120
        %v800 = vsel %vm798, %v711, 0
        %v803 = vsel %vm798, %v784, 0
        %805 = vmatprep.subr.mxu0 0.0
        %806 = vmatpush1.msra.mxu0 %v794
        %807 = vmatprep.subr.mxu0 0.0
        %808 = vmatpush1.msra.mxu0 %v795
        %809 = vmatprep.subr.mxu0 0.0
        %810 = vmatpush1.msra.mxu0 %v796
        %811 = vmatprep.subr.mxu0 0.0
        %812 = vmatpush1.msra.mxu0 %v797
        %813 = vmatprep.subr.mxu0 0.0
        %814 = vmatpush1.msra.mxu0 0.0
        %815 = vmatprep.subr.mxu0 0.0
        %816 = vmatpush1.msra.mxu0 0.0
        %817 = vmatprep.subr.mxu0 0.0
        %818 = vmatpush1.msra.mxu0 0.0
        %819 = vmatprep.subr.mxu0 0.0
        %820 = vmatpush1.msra.mxu0 0.0
        %821 = vmatprep.subr.mxu0 0.0
        %822 = vmatpush1.msra.mxu0 0.0
        %823 = vmatprep.subr.mxu0 0.0
        %824 = vmatpush1.msra.mxu0 0.0
        %825 = vmatprep.subr.mxu0 0.0
        %826 = vmatpush1.msra.mxu0 0.0
        %827 = vmatprep.subr.mxu0 0.0
        %828 = vmatpush1.msra.mxu0 0.0
        %829 = vmatprep.subr.mxu0 0.0
        %830 = vmatpush1.msra.mxu0 0.0
        %831 = vmatprep.subr.mxu0 0.0
        %832 = vmatpush1.msra.mxu0 0.0
        %833 = vmatprep.subr.mxu0 0.0
        %834 = vmatpush1.msra.mxu0 0.0
        %835 = vmatprep.subr.mxu0 0.0
        %836 = vmatpush1.msra.mxu0 0.0
        %837 = vmatprep.subr.mxu0 0.0
        %838 = vmatpush1.msra.mxu0 0.0
        %839 = vmatprep.subr.mxu0 0.0
        %840 = vmatpush1.msra.mxu0 0.0
        %841 = vmatprep.subr.mxu0 0.0
        %842 = vmatpush1.msra.mxu0 0.0
        %843 = vmatprep.subr.mxu0 0.0
        %844 = vmatpush1.msra.mxu0 0.0
        %845 = vmatprep.subr.mxu0 0.0
        %846 = vmatpush1.msra.mxu0 0.0
        %847 = vmatprep.subr.mxu0 0.0
        %848 = vmatpush1.msra.mxu0 0.0
        %849 = vmatprep.subr.mxu0 0.0
        %850 = vmatpush1.msra.mxu0 0.0
        %851 = vmatprep.subr.mxu0 0.0
        %852 = vmatpush1.msra.mxu0 0.0
        %853 = vmatprep.subr.mxu0 0.0
        %854 = vmatpush1.msra.mxu0 0.0
        %855 = vmatprep.subr.mxu0 0.0
        %856 = vmatpush1.msra.mxu0 0.0
        %857 = vmatprep.subr.mxu0 0.0
        %858 = vmatpush1.msra.mxu0 0.0
        %859 = vmatprep.subr.mxu0 0.0
        %860 = vmatpush1.msra.mxu0 0.0
        %861 = vmatprep.subr.mxu0 0.0
        %862 = vmatpush1.msra.mxu0 0.0
        %863 = vmatprep.subr.mxu0 0.0
        %864 = vmatpush1.msra.mxu0 0.0
        %865 = vmatprep.subr.mxu0 0.0
        %866 = vmatpush1.msra.mxu0 0.0
        %867 = vmatprep.subr.mxu0 0.0
        %868 = vmatpush1.msra.mxu0 0.0
        %869 = vmatprep.mubr.f32.mxu0 0.0
        %870 = vmatmul.mubr.f32.gmra.mrb[0].mxu0 %v800
        %v871 = vpop.f32.mrb[0].mxu0
        %v872 = vadd.f32 0.0, %v871
        %v873 = vpop.f32.mrb[0].mxu0
        %874 = vmatprep.mubr.f32.mxu0 0.0
        %875 = vmatmul.mubr.f32.gmra.mrb[0].mxu0 %v803
        %v876 = vpop.f32.mrb[0].mxu0
        %v877 = vadd.f32 0.0, %v876
        %v878 = vpop.f32.mrb[0].mxu0
        %879 = vdwg.mxu0
        %v881 = vsel %vm798, %v559, 0
        %v884 = vsel %vm798, %v632, 0
        %886 = vmatprep.subr.mxu0 0.0
        %887 = vmatpush1.msra.mxu0 %v789
        %888 = vmatprep.subr.mxu0 0.0
        %889 = vmatpush1.msra.mxu0 %v790
        %890 = vmatprep.subr.mxu0 0.0
        %891 = vmatpush1.msra.mxu0 %v791
        %892 = vmatprep.subr.mxu0 0.0
        %893 = vmatpush1.msra.mxu0 %v792
        %894 = vmatprep.subr.mxu0 0.0
        %895 = vmatpush1.msra.mxu0 0.0
        %896 = vmatprep.subr.mxu0 0.0
        %897 = vmatpush1.msra.mxu0 0.0
        %898 = vmatprep.subr.mxu0 0.0
        %899 = vmatpush1.msra.mxu0 0.0
        %900 = vmatprep.subr.mxu0 0.0
        %901 = vmatpush1.msra.mxu0 0.0
        %902 = vmatprep.subr.mxu0 0.0
        %903 = vmatpush1.msra.mxu0 0.0
        %904 = vmatprep.subr.mxu0 0.0
        %905 = vmatpush1.msra.mxu0 0.0
        %906 = vmatprep.subr.mxu0 0.0
        %907 = vmatpush1.msra.mxu0 0.0
        %908 = vmatprep.subr.mxu0 0.0
        %909 = vmatpush1.msra.mxu0 0.0
        %910 = vmatprep.subr.mxu0 0.0
        %911 = vmatpush1.msra.mxu0 0.0
        %912 = vmatprep.subr.mxu0 0.0
        %913 = vmatpush1.msra.mxu0 0.0
        %914 = vmatprep.subr.mxu0 0.0
        %915 = vmatpush1.msra.mxu0 0.0
        %916 = vmatprep.subr.mxu0 0.0
        %917 = vmatpush1.msra.mxu0 0.0
        %918 = vmatprep.subr.mxu0 0.0
        %919 = vmatpush1.msra.mxu0 0.0
        %920 = vmatprep.subr.mxu0 0.0
        %921 = vmatpush1.msra.mxu0 0.0
        %922 = vmatprep.subr.mxu0 0.0
        %923 = vmatpush1.msra.mxu0 0.0
        %924 = vmatprep.subr.mxu0 0.0
        %925 = vmatpush1.msra.mxu0 0.0
        %926 = vmatprep.subr.mxu0 0.0
        %927 = vmatpush1.msra.mxu0 0.0
        %928 = vmatprep.subr.mxu0 0.0
        %929 = vmatpush1.msra.mxu0 0.0
        %930 = vmatprep.subr.mxu0 0.0
        %931 = vmatpush1.msra.mxu0 0.0
        %932 = vmatprep.subr.mxu0 0.0
        %933 = vmatpush1.msra.mxu0 0.0
        %934 = vmatprep.subr.mxu0 0.0
        %935 = vmatpush1.msra.mxu0 0.0
        %936 = vmatprep.subr.mxu0 0.0
        %937 = vmatpush1.msra.mxu0 0.0
        %938 = vmatprep.subr.mxu0 0.0
        %939 = vmatpush1.msra.mxu0 0.0
        %940 = vmatprep.subr.mxu0 0.0
        %941 = vmatpush1.msra.mxu0 0.0
        %942 = vmatprep.subr.mxu0 0.0
        %943 = vmatpush1.msra.mxu0 0.0
        %944 = vmatprep.subr.mxu0 0.0
        %945 = vmatpush1.msra.mxu0 0.0
        %946 = vmatprep.subr.mxu0 0.0
        %947 = vmatpush1.msra.mxu0 0.0
        %948 = vmatprep.subr.mxu0 0.0
        %949 = vmatpush1.msra.mxu0 0.0
        %950 = vmatprep.mubr.f32.mxu0 0.0
        %951 = vmatmul.mubr.f32.gmra.mrb[0].mxu0 %v881
        %v952 = vpop.f32.mrb[0].mxu0
        %v953 = vadd.f32 %v872, %v952
        %v954 = vpop.f32.mrb[0].mxu0
        %955 = vmatprep.mubr.f32.mxu0 0.0
        %956 = vmatmul.mubr.f32.gmra.mrb[0].mxu0 %v884
        %v957 = vpop.f32.mrb[0].mxu0
        %v958 = vadd.f32 %v877, %v957
        %v959 = vpop.f32.mrb[0].mxu0
        %960 = vdwg.mxu0
        %s961 = scalar_lea.vmem %s5, 64
        %v962 = vld [vmem:[%s961] sm:$0xff]
        %v963 = vld [vmem:[%s961 + $0x8] sm:$0xff]
        %v964 = vld [vmem:[%s961 + $0x10] sm:$0xff]
        %v965 = vld [vmem:[%s961 + $0x18] sm:$0xff]
        %v967 = vsel %vm798, %v787, 0
        %v970 = vsel %vm798, %v788, 0
        %972 = vmatprep.subr.mxu0 0.0
        %973 = vmatpush1.msra.mxu0 %v962
        %974 = vmatprep.subr.mxu0 0.0
        %975 = vmatpush1.msra.mxu0 %v963
        %976 = vmatprep.subr.mxu0 0.0
        %977 = vmatpush1.msra.mxu0 %v964
        %978 = vmatprep.subr.mxu0 0.0
        %979 = vmatpush1.msra.mxu0 %v965
        %980 = vmatprep.subr.mxu0 0.0
        %981 = vmatpush1.msra.mxu0 0.0
        %982 = vmatprep.subr.mxu0 0.0
        %983 = vmatpush1.msra.mxu0 0.0
        %984 = vmatprep.subr.mxu0 0.0
        %985 = vmatpush1.msra.mxu0 0.0
        %986 = vmatprep.subr.mxu0 0.0
        %987 = vmatpush1.msra.mxu0 0.0
        %988 = vmatprep.subr.mxu0 0.0
        %989 = vmatpush1.msra.mxu0 0.0
        %990 = vmatprep.subr.mxu0 0.0
        %991 = vmatpush1.msra.mxu0 0.0
        %992 = vmatprep.subr.mxu0 0.0
        %993 = vmatpush1.msra.mxu0 0.0
        %994 = vmatprep.subr.mxu0 0.0
        %995 = vmatpush1.msra.mxu0 0.0
        %996 = vmatprep.subr.mxu0 0.0
        %997 = vmatpush1.msra.mxu0 0.0
        %998 = vmatprep.subr.mxu0 0.0
        %999 = vmatpush1.msra.mxu0 0.0
        %1000 = vmatprep.subr.mxu0 0.0
        %1001 = vmatpush1.msra.mxu0 0.0
        %1002 = vmatprep.subr.mxu0 0.0
        %1003 = vmatpush1.msra.mxu0 0.0
        %1004 = vmatprep.subr.mxu0 0.0
        %1005 = vmatpush1.msra.mxu0 0.0
        %1006 = vmatprep.subr.mxu0 0.0
        %1007 = vmatpush1.msra.mxu0 0.0
        %1008 = vmatprep.subr.mxu0 0.0
        %1009 = vmatpush1.msra.mxu0 0.0
        %1010 = vmatprep.subr.mxu0 0.0
        %1011 = vmatpush1.msra.mxu0 0.0
        %1012 = vmatprep.subr.mxu0 0.0
        %1013 = vmatpush1.msra.mxu0 0.0
        %1014 = vmatprep.subr.mxu0 0.0
        %1015 = vmatpush1.msra.mxu0 0.0
        %1016 = vmatprep.subr.mxu0 0.0
        %1017 = vmatpush1.msra.mxu0 0.0
        %1018 = vmatprep.subr.mxu0 0.0
        %1019 = vmatpush1.msra.mxu0 0.0
        %1020 = vmatprep.subr.mxu0 0.0
        %1021 = vmatpush1.msra.mxu0 0.0
        %1022 = vmatprep.subr.mxu0 0.0
        %1023 = vmatpush1.msra.mxu0 0.0
        %1024 = vmatprep.subr.mxu0 0.0
        %1025 = vmatpush1.msra.mxu0 0.0
        %1026 = vmatprep.subr.mxu0 0.0
        %1027 = vmatpush1.msra.mxu0 0.0
        %1028 = vmatprep.subr.mxu0 0.0
        %1029 = vmatpush1.msra.mxu0 0.0
        %1030 = vmatprep.subr.mxu0 0.0
        %1031 = vmatpush1.msra.mxu0 0.0
        %1032 = vmatprep.subr.mxu0 0.0
        %1033 = vmatpush1.msra.mxu0 0.0
        %1034 = vmatprep.subr.mxu0 0.0
        %1035 = vmatpush1.msra.mxu0 0.0
        %1036 = vmatprep.mubr.f32.mxu0 0.0
        %1037 = vmatmul.mubr.f32.gmra.mrb[0].mxu0 %v967
        %v1038 = vpop.f32.mrb[0].mxu0
        %v1039 = vadd.f32 0.0, %v1038
        %v1040 = vpop.f32.mrb[0].mxu0
        %1041 = vmatprep.mubr.f32.mxu0 0.0
        %1042 = vmatmul.mubr.f32.gmra.mrb[0].mxu0 %v970
        %v1043 = vpop.f32.mrb[0].mxu0
        %v1044 = vadd.f32 0.0, %v1043
        %v1045 = vpop.f32.mrb[0].mxu0
        %1046 = vdwg.mxu0
        %v1047 = vadd.f32 %v953, %v1039
        %v1048 = vadd.f32 %v958, %v1044
        %v1049 = vld [vmem:[%s8] sm:$0x1]
        %v1051 = vlaneseq
        %v1052 = vshrl.u32 %v1051, 7
        %v1053 = vsub.s32 0, %v1052
        %v1054 = vrot.slane %v1049, %v1053
        %v1056 = vadd.f32 %v1047, %v1054
        %v1057 = vadd.f32 %v1048, %v1054
        %v1058 = vxor.u32 %v1056, 2147483648
        %v1059 = vxor.u32 %v1057, 2147483648
        %v1060 = vmul.f32 %v1058, 1.442695
        %v1061 = vpow.pop %v1060
        %v1062 = vmul.f32 %v1059, 1.442695
        %v1063 = vpow.pop %v1062
        %v1064 = vadd.f32 %v1061, 1.0
        %v1065 = vadd.f32 %v1063, 1.0
        %v1066 = vrcp.pop %v1064
        %v1067 = vmul.f32 1.0, %v1066
        %v1068 = vrcp.pop %v1065
        %v1069 = vmul.f32 1.0, %v1068
        %v1070 = vld [vmem:[%s6] sm:$0xff]
        %v1071 = vld [vmem:[%s6 + $0x8] sm:$0xff]
        %v1072 = vld [vmem:[%s6 + $0x10] sm:$0xff]
        %v1073 = vld [vmem:[%s6 + $0x18] sm:$0xff]
        %s1074 = scalar_lea.vmem %s6, 32
        %v1075 = vld [vmem:[%s1074] sm:$0xff]
        %v1076 = vld [vmem:[%s1074 + $0x8] sm:$0xff]
        %v1077 = vld [vmem:[%s1074 + $0x10] sm:$0xff]
        %v1078 = vld [vmem:[%s1074 + $0x18] sm:$0xff]
        %1079 = vmatprep.subr.mxu0 0.0
        %1080 = vmatpush1.msra.mxu0 %v1075
        %1081 = vmatprep.subr.mxu0 0.0
        %1082 = vmatpush1.msra.mxu0 %v1076
        %1083 = vmatprep.subr.mxu0 0.0
        %1084 = vmatpush1.msra.mxu0 %v1077
        %1085 = vmatprep.subr.mxu0 0.0
        %1086 = vmatpush1.msra.mxu0 %v1078
        %1087 = vmatprep.subr.mxu0 0.0
        %1088 = vmatpush1.msra.mxu0 0.0
        %1089 = vmatprep.subr.mxu0 0.0
        %1090 = vmatpush1.msra.mxu0 0.0
        %1091 = vmatprep.subr.mxu0 0.0
        %1092 = vmatpush1.msra.mxu0 0.0
        %1093 = vmatprep.subr.mxu0 0.0
        %1094 = vmatpush1.msra.mxu0 0.0
        %1095 = vmatprep.subr.mxu0 0.0
        %1096 = vmatpush1.msra.mxu0 0.0
        %1097 = vmatprep.subr.mxu0 0.0
        %1098 = vmatpush1.msra.mxu0 0.0
        %1099 = vmatprep.subr.mxu0 0.0
        %1100 = vmatpush1.msra.mxu0 0.0
        %1101 = vmatprep.subr.mxu0 0.0
        %1102 = vmatpush1.msra.mxu0 0.0
        %1103 = vmatprep.subr.mxu0 0.0
        %1104 = vmatpush1.msra.mxu0 0.0
        %1105 = vmatprep.subr.mxu0 0.0
        %1106 = vmatpush1.msra.mxu0 0.0
        %1107 = vmatprep.subr.mxu0 0.0
        %1108 = vmatpush1.msra.mxu0 0.0
        %1109 = vmatprep.subr.mxu0 0.0
        %1110 = vmatpush1.msra.mxu0 0.0
        %1111 = vmatprep.subr.mxu0 0.0
        %1112 = vmatpush1.msra.mxu0 0.0
        %1113 = vmatprep.subr.mxu0 0.0
        %1114 = vmatpush1.msra.mxu0 0.0
        %1115 = vmatprep.subr.mxu0 0.0
        %1116 = vmatpush1.msra.mxu0 0.0
        %1117 = vmatprep.subr.mxu0 0.0
        %1118 = vmatpush1.msra.mxu0 0.0
        %1119 = vmatprep.subr.mxu0 0.0
        %1120 = vmatpush1.msra.mxu0 0.0
        %1121 = vmatprep.subr.mxu0 0.0
        %1122 = vmatpush1.msra.mxu0 0.0
        %1123 = vmatprep.subr.mxu0 0.0
        %1124 = vmatpush1.msra.mxu0 0.0
        %1125 = vmatprep.subr.mxu0 0.0
        %1126 = vmatpush1.msra.mxu0 0.0
        %1127 = vmatprep.subr.mxu0 0.0
        %1128 = vmatpush1.msra.mxu0 0.0
        %1129 = vmatprep.subr.mxu0 0.0
        %1130 = vmatpush1.msra.mxu0 0.0
        %1131 = vmatprep.subr.mxu0 0.0
        %1132 = vmatpush1.msra.mxu0 0.0
        %1133 = vmatprep.subr.mxu0 0.0
        %1134 = vmatpush1.msra.mxu0 0.0
        %1135 = vmatprep.subr.mxu0 0.0
        %1136 = vmatpush1.msra.mxu0 0.0
        %1137 = vmatprep.subr.mxu0 0.0
        %1138 = vmatpush1.msra.mxu0 0.0
        %1139 = vmatprep.subr.mxu0 0.0
        %1140 = vmatpush1.msra.mxu0 0.0
        %1141 = vmatprep.subr.mxu0 0.0
        %1142 = vmatpush1.msra.mxu0 0.0
        %1143 = vmatprep.mubr.f32.mxu0 0.0
        %1144 = vmatmul.mubr.f32.gmra.mrb[0].mxu0 %v800
        %v1145 = vpop.f32.mrb[0].mxu0
        %v1146 = vadd.f32 0.0, %v1145
        %v1147 = vpop.f32.mrb[0].mxu0
        %1148 = vmatprep.mubr.f32.mxu0 0.0
        %1149 = vmatmul.mubr.f32.gmra.mrb[0].mxu0 %v803
        %v1150 = vpop.f32.mrb[0].mxu0
        %v1151 = vadd.f32 0.0, %v1150
        %v1152 = vpop.f32.mrb[0].mxu0
        %1153 = vdwg.mxu0
        %1154 = vmatprep.subr.mxu0 0.0
        %1155 = vmatpush1.msra.mxu0 %v1070
        %1156 = vmatprep.subr.mxu0 0.0
        %1157 = vmatpush1.msra.mxu0 %v1071
        %1158 = vmatprep.subr.mxu0 0.0
        %1159 = vmatpush1.msra.mxu0 %v1072
        %1160 = vmatprep.subr.mxu0 0.0
        %1161 = vmatpush1.msra.mxu0 %v1073
        %1162 = vmatprep.subr.mxu0 0.0
        %1163 = vmatpush1.msra.mxu0 0.0
        %1164 = vmatprep.subr.mxu0 0.0
        %1165 = vmatpush1.msra.mxu0 0.0
        %1166 = vmatprep.subr.mxu0 0.0
        %1167 = vmatpush1.msra.mxu0 0.0
        %1168 = vmatprep.subr.mxu0 0.0
        %1169 = vmatpush1.msra.mxu0 0.0
        %1170 = vmatprep.subr.mxu0 0.0
        %1171 = vmatpush1.msra.mxu0 0.0
        %1172 = vmatprep.subr.mxu0 0.0
        %1173 = vmatpush1.msra.mxu0 0.0
        %1174 = vmatprep.subr.mxu0 0.0
        %1175 = vmatpush1.msra.mxu0 0.0
        %1176 = vmatprep.subr.mxu0 0.0
        %1177 = vmatpush1.msra.mxu0 0.0
        %1178 = vmatprep.subr.mxu0 0.0
        %1179 = vmatpush1.msra.mxu0 0.0
        %1180 = vmatprep.subr.mxu0 0.0
        %1181 = vmatpush1.msra.mxu0 0.0
        %1182 = vmatprep.subr.mxu0 0.0
        %1183 = vmatpush1.msra.mxu0 0.0
        %1184 = vmatprep.subr.mxu0 0.0
        %1185 = vmatpush1.msra.mxu0 0.0
        %1186 = vmatprep.subr.mxu0 0.0
        %1187 = vmatpush1.msra.mxu0 0.0
        %1188 = vmatprep.subr.mxu0 0.0
        %1189 = vmatpush1.msra.mxu0 0.0
        %1190 = vmatprep.subr.mxu0 0.0
        %1191 = vmatpush1.msra.mxu0 0.0
        %1192 = vmatprep.subr.mxu0 0.0
        %1193 = vmatpush1.msra.mxu0 0.0
        %1194 = vmatprep.subr.mxu0 0.0
        %1195 = vmatpush1.msra.mxu0 0.0
        %1196 = vmatprep.subr.mxu0 0.0
        %1197 = vmatpush1.msra.mxu0 0.0
        %1198 = vmatprep.subr.mxu0 0.0
        %1199 = vmatpush1.msra.mxu0 0.0
        %1200 = vmatprep.subr.mxu0 0.0
        %1201 = vmatpush1.msra.mxu0 0.0
        %1202 = vmatprep.subr.mxu0 0.0
        %1203 = vmatpush1.msra.mxu0 0.0
        %1204 = vmatprep.subr.mxu0 0.0
        %1205 = vmatpush1.msra.mxu0 0.0
        %1206 = vmatprep.subr.mxu0 0.0
        %1207 = vmatpush1.msra.mxu0 0.0
        %1208 = vmatprep.subr.mxu0 0.0
        %1209 = vmatpush1.msra.mxu0 0.0
        %1210 = vmatprep.subr.mxu0 0.0
        %1211 = vmatpush1.msra.mxu0 0.0
        %1212 = vmatprep.subr.mxu0 0.0
        %1213 = vmatpush1.msra.mxu0 0.0
        %1214 = vmatprep.subr.mxu0 0.0
        %1215 = vmatpush1.msra.mxu0 0.0
        %1216 = vmatprep.subr.mxu0 0.0
        %1217 = vmatpush1.msra.mxu0 0.0
        %1218 = vmatprep.mubr.f32.mxu0 0.0
        %1219 = vmatmul.mubr.f32.gmra.mrb[0].mxu0 %v881
        %v1220 = vpop.f32.mrb[0].mxu0
        %v1221 = vadd.f32 %v1146, %v1220
        %v1222 = vpop.f32.mrb[0].mxu0
        %1223 = vmatprep.mubr.f32.mxu0 0.0
        %1224 = vmatmul.mubr.f32.gmra.mrb[0].mxu0 %v884
        %v1225 = vpop.f32.mrb[0].mxu0
        %v1226 = vadd.f32 %v1151, %v1225
        %v1227 = vpop.f32.mrb[0].mxu0
        %1228 = vdwg.mxu0
        %s1229 = scalar_lea.vmem %s6, 64
        %v1230 = vld [vmem:[%s1229] sm:$0xff]
        %v1231 = vld [vmem:[%s1229 + $0x8] sm:$0xff]
        %v1232 = vld [vmem:[%s1229 + $0x10] sm:$0xff]
        %v1233 = vld [vmem:[%s1229 + $0x18] sm:$0xff]
        %1234 = vmatprep.subr.mxu0 0.0
        %1235 = vmatpush1.msra.mxu0 %v1230
        %1236 = vmatprep.subr.mxu0 0.0
        %1237 = vmatpush1.msra.mxu0 %v1231
        %1238 = vmatprep.subr.mxu0 0.0
        %1239 = vmatpush1.msra.mxu0 %v1232
        %1240 = vmatprep.subr.mxu0 0.0
        %1241 = vmatpush1.msra.mxu0 %v1233
        %1242 = vmatprep.subr.mxu0 0.0
        %1243 = vmatpush1.msra.mxu0 0.0
        %1244 = vmatprep.subr.mxu0 0.0
        %1245 = vmatpush1.msra.mxu0 0.0
        %1246 = vmatprep.subr.mxu0 0.0
        %1247 = vmatpush1.msra.mxu0 0.0
        %1248 = vmatprep.subr.mxu0 0.0
        %1249 = vmatpush1.msra.mxu0 0.0
        %1250 = vmatprep.subr.mxu0 0.0
        %1251 = vmatpush1.msra.mxu0 0.0
        %1252 = vmatprep.subr.mxu0 0.0
        %1253 = vmatpush1.msra.mxu0 0.0
        %1254 = vmatprep.subr.mxu0 0.0
        %1255 = vmatpush1.msra.mxu0 0.0
        %1256 = vmatprep.subr.mxu0 0.0
        %1257 = vmatpush1.msra.mxu0 0.0
        %1258 = vmatprep.subr.mxu0 0.0
        %1259 = vmatpush1.msra.mxu0 0.0
        %1260 = vmatprep.subr.mxu0 0.0
        %1261 = vmatpush1.msra.mxu0 0.0
        %1262 = vmatprep.subr.mxu0 0.0
        %1263 = vmatpush1.msra.mxu0 0.0
        %1264 = vmatprep.subr.mxu0 0.0
        %1265 = vmatpush1.msra.mxu0 0.0
        %1266 = vmatprep.subr.mxu0 0.0
        %1267 = vmatpush1.msra.mxu0 0.0
        %1268 = vmatprep.subr.mxu0 0.0
        %1269 = vmatpush1.msra.mxu0 0.0
        %1270 = vmatprep.subr.mxu0 0.0
        %1271 = vmatpush1.msra.mxu0 0.0
        %1272 = vmatprep.subr.mxu0 0.0
        %1273 = vmatpush1.msra.mxu0 0.0
        %1274 = vmatprep.subr.mxu0 0.0
        %1275 = vmatpush1.msra.mxu0 0.0
        %1276 = vmatprep.subr.mxu0 0.0
        %1277 = vmatpush1.msra.mxu0 0.0
        %1278 = vmatprep.subr.mxu0 0.0
        %1279 = vmatpush1.msra.mxu0 0.0
        %1280 = vmatprep.subr.mxu0 0.0
        %1281 = vmatpush1.msra.mxu0 0.0
        %1282 = vmatprep.subr.mxu0 0.0
        %1283 = vmatpush1.msra.mxu0 0.0
        %1284 = vmatprep.subr.mxu0 0.0
        %1285 = vmatpush1.msra.mxu0 0.0
        %1286 = vmatprep.subr.mxu0 0.0
        %1287 = vmatpush1.msra.mxu0 0.0
        %1288 = vmatprep.subr.mxu0 0.0
        %1289 = vmatpush1.msra.mxu0 0.0
        %1290 = vmatprep.subr.mxu0 0.0
        %1291 = vmatpush1.msra.mxu0 0.0
        %1292 = vmatprep.subr.mxu0 0.0
        %1293 = vmatpush1.msra.mxu0 0.0
        %1294 = vmatprep.subr.mxu0 0.0
        %1295 = vmatpush1.msra.mxu0 0.0
        %1296 = vmatprep.subr.mxu0 0.0
        %1297 = vmatpush1.msra.mxu0 0.0
        %1298 = vmatprep.mubr.f32.mxu0 0.0
        %1299 = vmatmul.mubr.f32.gmra.mrb[0].mxu0 %v967
        %v1300 = vpop.f32.mrb[0].mxu0
        %v1301 = vadd.f32 0.0, %v1300
        %v1302 = vpop.f32.mrb[0].mxu0
        %1303 = vmatprep.mubr.f32.mxu0 0.0
        %1304 = vmatmul.mubr.f32.gmra.mrb[0].mxu0 %v970
        %v1305 = vpop.f32.mrb[0].mxu0
        %v1306 = vadd.f32 0.0, %v1305
        %v1307 = vpop.f32.mrb[0].mxu0
        %1308 = vdwg.mxu0
        %v1309 = vadd.f32 %v1221, %v1301
        %v1310 = vadd.f32 %v1226, %v1306
        %v1311 = vld [vmem:[%s9] sm:$0x1]
        %v1313 = vlaneseq
        %v1314 = vshrl.u32 %v1313, 7
        %v1315 = vsub.s32 0, %v1314
        %v1316 = vrot.slane %v1311, %v1315
        %v1318 = vadd.f32 %v1309, %v1316
        %v1319 = vadd.f32 %v1310, %v1316
        %v1320 = vxor.u32 %v1318, 2147483648
        %v1321 = vxor.u32 %v1319, 2147483648
        %v1322 = vmul.f32 %v1320, 1.442695
        %v1323 = vpow.pop %v1322
        %v1324 = vmul.f32 %v1321, 1.442695
        %v1325 = vpow.pop %v1324
        %v1326 = vadd.f32 %v1323, 1.0
        %v1327 = vadd.f32 %v1325, 1.0
        %v1328 = vrcp.pop %v1326
        %v1329 = vmul.f32 1.0, %v1328
        %v1330 = vrcp.pop %v1327
        %v1331 = vmul.f32 1.0, %v1330
        %v1332 = vmul.f32 %v1067, %v787
        %v1333 = vmul.f32 %v1069, %v788
        %v1334 = vld [vmem:[%s7] sm:$0xff]
        %v1335 = vld [vmem:[%s7 + $0x8] sm:$0xff]
        %v1336 = vld [vmem:[%s7 + $0x10] sm:$0xff]
        %v1337 = vld [vmem:[%s7 + $0x18] sm:$0xff]
        %s1338 = scalar_lea.vmem %s7, 32
        %v1339 = vld [vmem:[%s1338] sm:$0xff]
        %v1340 = vld [vmem:[%s1338 + $0x8] sm:$0xff]
        %v1341 = vld [vmem:[%s1338 + $0x10] sm:$0xff]
        %v1342 = vld [vmem:[%s1338 + $0x18] sm:$0xff]
        %1343 = vmatprep.subr.mxu0 0.0
        %1344 = vmatpush1.msra.mxu0 %v1339
        %1345 = vmatprep.subr.mxu0 0.0
        %1346 = vmatpush1.msra.mxu0 %v1340
        %1347 = vmatprep.subr.mxu0 0.0
        %1348 = vmatpush1.msra.mxu0 %v1341
        %1349 = vmatprep.subr.mxu0 0.0
        %1350 = vmatpush1.msra.mxu0 %v1342
        %1351 = vmatprep.subr.mxu0 0.0
        %1352 = vmatpush1.msra.mxu0 0.0
        %1353 = vmatprep.subr.mxu0 0.0
        %1354 = vmatpush1.msra.mxu0 0.0
        %1355 = vmatprep.subr.mxu0 0.0
        %1356 = vmatpush1.msra.mxu0 0.0
        %1357 = vmatprep.subr.mxu0 0.0
        %1358 = vmatpush1.msra.mxu0 0.0
        %1359 = vmatprep.subr.mxu0 0.0
        %1360 = vmatpush1.msra.mxu0 0.0
        %1361 = vmatprep.subr.mxu0 0.0
        %1362 = vmatpush1.msra.mxu0 0.0
        %1363 = vmatprep.subr.mxu0 0.0
        %1364 = vmatpush1.msra.mxu0 0.0
        %1365 = vmatprep.subr.mxu0 0.0
        %1366 = vmatpush1.msra.mxu0 0.0
        %1367 = vmatprep.subr.mxu0 0.0
        %1368 = vmatpush1.msra.mxu0 0.0
        %1369 = vmatprep.subr.mxu0 0.0
        %1370 = vmatpush1.msra.mxu0 0.0
        %1371 = vmatprep.subr.mxu0 0.0
        %1372 = vmatpush1.msra.mxu0 0.0
        %1373 = vmatprep.subr.mxu0 0.0
        %1374 = vmatpush1.msra.mxu0 0.0
        %1375 = vmatprep.subr.mxu0 0.0
        %1376 = vmatpush1.msra.mxu0 0.0
        %1377 = vmatprep.subr.mxu0 0.0
        %1378 = vmatpush1.msra.mxu0 0.0
        %1379 = vmatprep.subr.mxu0 0.0
        %1380 = vmatpush1.msra.mxu0 0.0
        %1381 = vmatprep.subr.mxu0 0.0
        %1382 = vmatpush1.msra.mxu0 0.0
        %1383 = vmatprep.subr.mxu0 0.0
        %1384 = vmatpush1.msra.mxu0 0.0
        %1385 = vmatprep.subr.mxu0 0.0
        %1386 = vmatpush1.msra.mxu0 0.0
        %1387 = vmatprep.subr.mxu0 0.0
        %1388 = vmatpush1.msra.mxu0 0.0
        %1389 = vmatprep.subr.mxu0 0.0
        %1390 = vmatpush1.msra.mxu0 0.0
        %1391 = vmatprep.subr.mxu0 0.0
        %1392 = vmatpush1.msra.mxu0 0.0
        %1393 = vmatprep.subr.mxu0 0.0
        %1394 = vmatpush1.msra.mxu0 0.0
        %1395 = vmatprep.subr.mxu0 0.0
        %1396 = vmatpush1.msra.mxu0 0.0
        %1397 = vmatprep.subr.mxu0 0.0
        %1398 = vmatpush1.msra.mxu0 0.0
        %1399 = vmatprep.subr.mxu0 0.0
        %1400 = vmatpush1.msra.mxu0 0.0
        %1401 = vmatprep.subr.mxu0 0.0
        %1402 = vmatpush1.msra.mxu0 0.0
        %1403 = vmatprep.subr.mxu0 0.0
        %1404 = vmatpush1.msra.mxu0 0.0
        %1405 = vmatprep.subr.mxu0 0.0
        %1406 = vmatpush1.msra.mxu0 0.0
        %1407 = vmatprep.mubr.f32.mxu0 0.0
        %1408 = vmatmul.mubr.f32.gmra.mrb[0].mxu0 %v800
        %v1409 = vpop.f32.mrb[0].mxu0
        %v1410 = vadd.f32 0.0, %v1409
        %v1411 = vpop.f32.mrb[0].mxu0
        %1412 = vmatprep.mubr.f32.mxu0 0.0
        %1413 = vmatmul.mubr.f32.gmra.mrb[0].mxu0 %v803
        %v1414 = vpop.f32.mrb[0].mxu0
        %v1415 = vadd.f32 0.0, %v1414
        %v1416 = vpop.f32.mrb[0].mxu0
        %1417 = vdwg.mxu0
        %1418 = vmatprep.subr.mxu0 0.0
        %1419 = vmatpush1.msra.mxu0 %v1334
        %1420 = vmatprep.subr.mxu0 0.0
        %1421 = vmatpush1.msra.mxu0 %v1335
        %1422 = vmatprep.subr.mxu0 0.0
        %1423 = vmatpush1.msra.mxu0 %v1336
        %1424 = vmatprep.subr.mxu0 0.0
        %1425 = vmatpush1.msra.mxu0 %v1337
        %1426 = vmatprep.subr.mxu0 0.0
        %1427 = vmatpush1.msra.mxu0 0.0
        %1428 = vmatprep.subr.mxu0 0.0
        %1429 = vmatpush1.msra.mxu0 0.0
        %1430 = vmatprep.subr.mxu0 0.0
        %1431 = vmatpush1.msra.mxu0 0.0
        %1432 = vmatprep.subr.mxu0 0.0
        %1433 = vmatpush1.msra.mxu0 0.0
        %1434 = vmatprep.subr.mxu0 0.0
        %1435 = vmatpush1.msra.mxu0 0.0
        %1436 = vmatprep.subr.mxu0 0.0
        %1437 = vmatpush1.msra.mxu0 0.0
        %1438 = vmatprep.subr.mxu0 0.0
        %1439 = vmatpush1.msra.mxu0 0.0
        %1440 = vmatprep.subr.mxu0 0.0
        %1441 = vmatpush1.msra.mxu0 0.0
        %1442 = vmatprep.subr.mxu0 0.0
        %1443 = vmatpush1.msra.mxu0 0.0
        %1444 = vmatprep.subr.mxu0 0.0
        %1445 = vmatpush1.msra.mxu0 0.0
        %1446 = vmatprep.subr.mxu0 0.0
        %1447 = vmatpush1.msra.mxu0 0.0
        %1448 = vmatprep.subr.mxu0 0.0
        %1449 = vmatpush1.msra.mxu0 0.0
        %1450 = vmatprep.subr.mxu0 0.0
        %1451 = vmatpush1.msra.mxu0 0.0
        %1452 = vmatprep.subr.mxu0 0.0
        %1453 = vmatpush1.msra.mxu0 0.0
        %1454 = vmatprep.subr.mxu0 0.0
        %1455 = vmatpush1.msra.mxu0 0.0
        %1456 = vmatprep.subr.mxu0 0.0
        %1457 = vmatpush1.msra.mxu0 0.0
        %1458 = vmatprep.subr.mxu0 0.0
        %1459 = vmatpush1.msra.mxu0 0.0
        %1460 = vmatprep.subr.mxu0 0.0
        %1461 = vmatpush1.msra.mxu0 0.0
        %1462 = vmatprep.subr.mxu0 0.0
        %1463 = vmatpush1.msra.mxu0 0.0
        %1464 = vmatprep.subr.mxu0 0.0
        %1465 = vmatpush1.msra.mxu0 0.0
        %1466 = vmatprep.subr.mxu0 0.0
        %1467 = vmatpush1.msra.mxu0 0.0
        %1468 = vmatprep.subr.mxu0 0.0
        %1469 = vmatpush1.msra.mxu0 0.0
        %1470 = vmatprep.subr.mxu0 0.0
        %1471 = vmatpush1.msra.mxu0 0.0
        %1472 = vmatprep.subr.mxu0 0.0
        %1473 = vmatpush1.msra.mxu0 0.0
        %1474 = vmatprep.subr.mxu0 0.0
        %1475 = vmatpush1.msra.mxu0 0.0
        %1476 = vmatprep.subr.mxu0 0.0
        %1477 = vmatpush1.msra.mxu0 0.0
        %1478 = vmatprep.subr.mxu0 0.0
        %1479 = vmatpush1.msra.mxu0 0.0
        %1480 = vmatprep.subr.mxu0 0.0
        %1481 = vmatpush1.msra.mxu0 0.0
        %1482 = vmatprep.mubr.f32.mxu0 0.0
        %1483 = vmatmul.mubr.f32.gmra.mrb[0].mxu0 %v881
        %v1484 = vpop.f32.mrb[0].mxu0
        %v1485 = vadd.f32 %v1410, %v1484
        %v1486 = vpop.f32.mrb[0].mxu0
        %1487 = vmatprep.mubr.f32.mxu0 0.0
        %1488 = vmatmul.mubr.f32.gmra.mrb[0].mxu0 %v884
        %v1489 = vpop.f32.mrb[0].mxu0
        %v1490 = vadd.f32 %v1415, %v1489
        %v1491 = vpop.f32.mrb[0].mxu0
        %1492 = vdwg.mxu0
        %s1493 = scalar_lea.vmem %s7, 64
        %v1494 = vld [vmem:[%s1493] sm:$0xff]
        %v1495 = vld [vmem:[%s1493 + $0x8] sm:$0xff]
        %v1496 = vld [vmem:[%s1493 + $0x10] sm:$0xff]
        %v1497 = vld [vmem:[%s1493 + $0x18] sm:$0xff]
        %v1499 = vsel %vm798, %v1332, 0
        %v1502 = vsel %vm798, %v1333, 0
        %1504 = vmatprep.subr.mxu0 0.0
        %1505 = vmatpush1.msra.mxu0 %v1494
        %1506 = vmatprep.subr.mxu0 0.0
        %1507 = vmatpush1.msra.mxu0 %v1495
        %1508 = vmatprep.subr.mxu0 0.0
        %1509 = vmatpush1.msra.mxu0 %v1496
        %1510 = vmatprep.subr.mxu0 0.0
        %1511 = vmatpush1.msra.mxu0 %v1497
        %1512 = vmatprep.subr.mxu0 0.0
        %1513 = vmatpush1.msra.mxu0 0.0
        %1514 = vmatprep.subr.mxu0 0.0
        %1515 = vmatpush1.msra.mxu0 0.0
        %1516 = vmatprep.subr.mxu0 0.0
        %1517 = vmatpush1.msra.mxu0 0.0
        %1518 = vmatprep.subr.mxu0 0.0
        %1519 = vmatpush1.msra.mxu0 0.0
        %1520 = vmatprep.subr.mxu0 0.0
        %1521 = vmatpush1.msra.mxu0 0.0
        %1522 = vmatprep.subr.mxu0 0.0
        %1523 = vmatpush1.msra.mxu0 0.0
        %1524 = vmatprep.subr.mxu0 0.0
        %1525 = vmatpush1.msra.mxu0 0.0
        %1526 = vmatprep.subr.mxu0 0.0
        %1527 = vmatpush1.msra.mxu0 0.0
        %1528 = vmatprep.subr.mxu0 0.0
        %1529 = vmatpush1.msra.mxu0 0.0
        %1530 = vmatprep.subr.mxu0 0.0
        %1531 = vmatpush1.msra.mxu0 0.0
        %1532 = vmatprep.subr.mxu0 0.0
        %1533 = vmatpush1.msra.mxu0 0.0
        %1534 = vmatprep.subr.mxu0 0.0
        %1535 = vmatpush1.msra.mxu0 0.0
        %1536 = vmatprep.subr.mxu0 0.0
        %1537 = vmatpush1.msra.mxu0 0.0
        %1538 = vmatprep.subr.mxu0 0.0
        %1539 = vmatpush1.msra.mxu0 0.0
        %1540 = vmatprep.subr.mxu0 0.0
        %1541 = vmatpush1.msra.mxu0 0.0
        %1542 = vmatprep.subr.mxu0 0.0
        %1543 = vmatpush1.msra.mxu0 0.0
        %1544 = vmatprep.subr.mxu0 0.0
        %1545 = vmatpush1.msra.mxu0 0.0
        %1546 = vmatprep.subr.mxu0 0.0
        %1547 = vmatpush1.msra.mxu0 0.0
        %1548 = vmatprep.subr.mxu0 0.0
        %1549 = vmatpush1.msra.mxu0 0.0
        %1550 = vmatprep.subr.mxu0 0.0
        %1551 = vmatpush1.msra.mxu0 0.0
        %1552 = vmatprep.subr.mxu0 0.0
        %1553 = vmatpush1.msra.mxu0 0.0
        %1554 = vmatprep.subr.mxu0 0.0
        %1555 = vmatpush1.msra.mxu0 0.0
        %1556 = vmatprep.subr.mxu0 0.0
        %1557 = vmatpush1.msra.mxu0 0.0
        %1558 = vmatprep.subr.mxu0 0.0
        %1559 = vmatpush1.msra.mxu0 0.0
        %1560 = vmatprep.subr.mxu0 0.0
        %1561 = vmatpush1.msra.mxu0 0.0
        %1562 = vmatprep.subr.mxu0 0.0
        %1563 = vmatpush1.msra.mxu0 0.0
        %1564 = vmatprep.subr.mxu0 0.0
        %1565 = vmatpush1.msra.mxu0 0.0
        %1566 = vmatprep.subr.mxu0 0.0
        %1567 = vmatpush1.msra.mxu0 0.0
        %1568 = vmatprep.mubr.f32.mxu0 0.0
        %1569 = vmatmul.mubr.f32.gmra.mrb[0].mxu0 %v1499
        %v1570 = vpop.f32.mrb[0].mxu0
        %v1571 = vadd.f32 0.0, %v1570
        %v1572 = vpop.f32.mrb[0].mxu0
        %1573 = vmatprep.mubr.f32.mxu0 0.0
        %1574 = vmatmul.mubr.f32.gmra.mrb[0].mxu0 %v1502
        %v1575 = vpop.f32.mrb[0].mxu0
        %v1576 = vadd.f32 0.0, %v1575
        %v1577 = vpop.f32.mrb[0].mxu0
        %1578 = vdwg.mxu0
        %v1579 = vadd.f32 %v1485, %v1571
        %v1580 = vadd.f32 %v1490, %v1576
        %v1581 = vld [vmem:[%s10] sm:$0x1]
        %v1583 = vlaneseq
        %v1584 = vshrl.u32 %v1583, 7
        %v1585 = vsub.s32 0, %v1584
        %v1586 = vrot.slane %v1581, %v1585
        %v1588 = vadd.f32 %v1579, %v1586
        %v1589 = vadd.f32 %v1580, %v1586
        %v1590 = vtanh.pop %v1588
        %v1591 = vtanh.pop %v1589
        %v1592 = vsub.f32 %v1590, %v787
        %v1593 = vsub.f32 %v1591, %v788
        %v1594 = vmul.f32 %v1329, %v1592
        %v1595 = vmul.f32 %v1331, %v1593
        %v1596 = vadd.f32 %v787, %v1594
        %v1597 = vadd.f32 %v788, %v1595
        %1598 = vst.msk [vmem:[%s448] sm:$0xff] %vm798, %v1596
        %1599 = vst.msk [vmem:[%s448 + $0x8] sm:$0xff] %vm798, %v1597
        %s1600 = sand.u32 %s289, 1
        %s1601 = scalar_lea.sflag [#allocation3], %s1600
        %s1602 = sand.u32 %s289, 1
        %s1603 = smul.addr %s1602, 16
        %s1604 = scalar_lea.vmem [#allocation2], %s1603
        // Predicated region
        $region65: #{propagator_forward.1} parent=63 // pred_check
          %p1605 = pneg %p299
        $region66: #{propagator_forward.1} parent=63 // pred_check_branch
          %1607 = sbr.rel (%p1605) target = $region68
        $region67: #{propagator_forward.1} parent=63 // pred_region
          %s1608 = smul.u32 2, %s25
          %s1610 = ssub.s32 256, 256
          %1611 = vsyncadd %s1601, %s1610
          %s1612 = smul.addr %s1608, 128
          %s1613 = scalar_lea.hbm %s11, %s1612
          %s1614 = sshll.u32 %s1604, 4
          %s1615 = int_to_ptr.vmem [resolvable:$true] %s1614
          %1620 = dma.vmem_to_hbm [thread:$0]  %s1615, 256, %s1613, %s1601, 128, 128, 8
        $region68: #{propagator_forward.1} parent=63 // pred_fallthru
          _
      $region64: #{propagator_forward.1} parent=5 // pred_fallthru
        _
      %p1621 = scmp.le.s32.totalorder 2, %s20
      // Predicated region
      $region69: #{propagator_forward.1} parent=5 // pred_check
        %p1622 = pneg %p1621
      $region70: #{propagator_forward.1} parent=5 // pred_check_branch
        %1624 = sbr.rel (%p1622) target = $region72
      $region71: #{propagator_forward.1} parent=5 // pred_region
        %s1625 = ssub.s32 %s20, 2
        // Predicated region
        $region73: #{propagator_forward.1} parent=71 // pred_check
          %p1626 = pneg %p305
        $region74: #{propagator_forward.1} parent=71 // pred_check_branch
          %1628 = sbr.rel (%p1626) target = $region76
        $region75: #{propagator_forward.1} parent=71 // pred_region
          %s1629 = sand.u32 %s290, 1
          %s1630 = scalar_lea.sflag [#allocation3], %s1629
          %s1631 = sand.u32 %s290, 1
          %s1632 = smul.addr %s1631, 16
          %s1633 = scalar_lea.vmem [#allocation2], %s1632
          %1634 = dma.done %s1630, 256
        $region76: #{propagator_forward.1} parent=71 // pred_fallthru
          _
      $region72: #{propagator_forward.1} parent=5 // pred_fallthru
        _
    $region6: #{propagator_forward.1} parent=1 // loop_footer
      %s24 = sadd.s32 1, %s20
    $region7: #{propagator_forward.1} parent=1 // loop_footer_branch
      %19 = sbr.rel target = $region3
    $region8: #{propagator_forward.1} parent=1 // loop_exit
      _
    %1635 = vsyncpa [#allocation3], 1
    %s1636 = scalar_lea.sflag [#allocation3], 1
    %1637 = vsyncpa %s1636, 1

</llo_original>
